<compile_context>
chip_gen: v7x
topology: tpu7x:2x2x1
jax: 0.10.0
libtpu: 0.0.40
codegen_flags: <defaults>
</compile_context>

<pallas_src>
import functools

import jax
import jax.numpy as jnp
from jax.experimental import pallas as pl
from jax.experimental.pallas import tpu as pltpu

# ---- small-BERT config (scaled-down 'bert-base-uncased' + 3-label head) ----
VOCAB = 100
TYPE_VOCAB = 2
MAX_POS = 16
HIDDEN = 32          # stands in for 768
NUM_HEADS = 2
HEAD_DIM = HIDDEN // NUM_HEADS
INTERMEDIATE = 64    # stands in for 3072
NUM_LAYERS = 2       # stands in for 12
NUM_LABELS = 3       # use_three_labels = True
LN_EPS = 1e-12
HP = 128             # lane-padded hidden width
IP = 128             # lane-padded intermediate width
CLS_PAD = 128        # lane-dense classifier head; real logits live in [:, :NUM_LABELS]


# ---------------- single fused Pallas kernel: one example per grid step ----------------

def _bert_fused_kernel(x_ref, mask_ref, gvec_ref, lvec_ref,
                       wqkv_ref, wo_ref, w1_ref, w2_ref,
                       pool_w_ref, cls_w_ref, o_ref, ctx_ref,
                       *, s, h, nh, hd, nl, eps):
    f32 = jnp.float32
    bf16 = jnp.bfloat16
    hp = ctx_ref.shape[-1]
    scale = 1.0 / float(hd) ** 0.5

    # lane mask for the real hidden width: padded lanes excluded from LN statistics
    hmask = (jax.lax.broadcasted_iota(jnp.int32, (1, hp), 1) < h).astype(f32)

    def layer_norm(xp, g, b):
        # xp is (rows, hp) with zero-padded lanes >= h; stats use the real width only.
        mean = jnp.sum(xp, axis=-1, keepdims=True) * (1.0 / h)
        diff = (xp - mean) * hmask
        var = jnp.sum(diff * diff, axis=-1, keepdims=True) * (1.0 / h)
        return diff * jax.lax.rsqrt(var + eps) * g + b      # pad lanes stay exactly 0

    gv = gvec_ref[...]                                       # (4, hp)
    emb_g, emb_b, pool_b, cls_b = gv[0:1], gv[1:2], gv[2:3], gv[3:4]

    # Embedding LayerNorm.
    x = layer_norm(x_ref[0], emb_g, emb_b)                   # (s, hp)

    # Additive padding bias, hoisted out of the layer/head loops (built once).
    bias = (1.0 - mask_ref[0]) * -1e9                        # (1, s)
    bias3 = jnp.broadcast_to(bias.reshape(1, 1, s), (nh, s, s))

    # Context scratch accumulator; zero once so padded lanes stay 0 for the wo matmul.
    ctx_ref[...] = jnp.zeros_like(ctx_ref)

    # TODO(synk): at real BERT-base scale this static unroll becomes a grid axis with
    # per-layer BlockSpec weight streaming; nl=2 here so unrolling is fine.
    for l in range(nl):
        lv = lvec_ref[l]                                     # (8, hp) packed bias/LN bundle
        bqkv, bo = lv[0:1, :3 * h], lv[1:2]
        ln1_g, ln1_b = lv[2:3], lv[3:4]
        b1, b2 = lv[4:5], lv[5:6]
        ln2_g, ln2_b = lv[6:7], lv[7:8]

        # Fused QKV projection (bf16 operands, f32 accumulate).
        qkv = jnp.dot(x.astype(bf16), wqkv_ref[l],
                      preferred_element_type=f32) + bqkv     # (s, 3h)

        # Stack heads on a leading batch axis (cheap major-dim concat, no transposes),
        # then both attention matmuls are a single batched dot_general over all heads.
        def heads(base):
            return jnp.stack([qkv[:, base + i * hd: base + (i + 1) * hd]
                              for i in range(nh)], axis=0)   # (nh, s, hd)

        q, k, v = heads(0), heads(h), heads(2 * h)
        sc = jnp.einsum('hqd,hkd->hqk', q.astype(bf16), k.astype(bf16),
                        preferred_element_type=f32) * scale + bias3
        sc = sc - jnp.max(sc, axis=-1, keepdims=True)
        p = jnp.exp(sc)
        p = p * pl.reciprocal(jnp.sum(p, axis=-1, keepdims=True), approx=True)
        ctx_h = jnp.einsum('hqk,hkd->hqd', p.astype(bf16), v.astype(bf16),
                           preferred_element_type=f32)       # (nh, s, hd)

        # Write per-head context straight into the VMEM scratch (no concatenates).
        for i in range(nh):
            ctx_ref[:, i * hd:(i + 1) * hd] = ctx_h[i]

        attn = jnp.dot(ctx_ref[...].astype(bf16), wo_ref[l],
                       preferred_element_type=f32) + bo
        x = layer_norm(attn + x, ln1_g, ln1_b)

        ff = jnp.dot(x.astype(bf16), w1_ref[l], preferred_element_type=f32) + b1
        # TODO(synk): HuggingFace BERT uses exact erf GELU; tanh approximation kept here.
        ff = jax.nn.gelu(ff, approximate=True)
        ff = jnp.dot(ff.astype(bf16), w2_ref[l], preferred_element_type=f32) + b2
        x = layer_norm(ff + x, ln2_g, ln2_b)

    # BERT pooler on the [CLS] token (row 0 of this example)  == `output_1`.
    pooled = jnp.tanh(jnp.dot(x[0:1, :].astype(bf16), pool_w_ref[...],
                              preferred_element_type=f32) + pool_b)
    # self.l2 = Dropout(DOUT): identity at inference time.
    logits = jnp.dot(pooled.astype(bf16), cls_w_ref[...],
                     preferred_element_type=f32) + cls_b
    o_ref[0] = logits.astype(o_ref.dtype)                    # (1, 128) lane-dense store


# ---------------- model glue (plain JAX) ----------------

def bert_class_forward(packed, ids, mask, token_type_ids):
    b, s = ids.shape
    # Embedding gathers stay in plain JAX (no clean tiny-scale Pallas equivalent).
    pos = jnp.arange(s)
    x = (packed["word_emb"][ids]
         + packed["pos_emb"][pos][None, :, :]
         + packed["type_emb"][token_type_ids])               # (b, s, HP), zero-padded lanes
    mask_f = mask.astype(jnp.float32).reshape(b, 1, s)

    kernel = functools.partial(_bert_fused_kernel, s=s, h=HIDDEN, nh=NUM_HEADS,
                               hd=HEAD_DIM, nl=NUM_LAYERS, eps=LN_EPS)
    out = pl.pallas_call(
        kernel,
        grid=(b,),
        out_shape=jax.ShapeDtypeStruct((b, 1, CLS_PAD), jnp.float32),
        in_specs=[
            pl.BlockSpec((1, s, HP), lambda i: (i, 0, 0)),                 # x (per example)
            pl.BlockSpec((1, 1, s), lambda i: (i, 0, 0)),                  # mask (per example)
            pl.BlockSpec((4, HP), lambda i: (0, 0)),                       # global vec bundle
            pl.BlockSpec((NUM_LAYERS, 8, HP), lambda i: (0, 0, 0)),        # per-layer vec bundle
            pl.BlockSpec((NUM_LAYERS, HP, 3 * HIDDEN), lambda i: (0, 0, 0)),
            pl.BlockSpec((NUM_LAYERS, HP, HP), lambda i: (0, 0, 0)),       # wo
            pl.BlockSpec((NUM_LAYERS, HP, IP), lambda i: (0, 0, 0)),       # w1
            pl.BlockSpec((NUM_LAYERS, IP, HP), lambda i: (0, 0, 0)),       # w2
            pl.BlockSpec((HP, HP), lambda i: (0, 0)),                      # pooler weight
            pl.BlockSpec((HP, CLS_PAD), lambda i: (0, 0)),                 # classifier weight
        ],
        out_specs=pl.BlockSpec((1, 1, CLS_PAD), lambda i: (i, 0, 0)),
        scratch_shapes=[pltpu.VMEM((s, HP), jnp.float32)],                 # ctx accumulator
        compiler_params=pltpu.CompilerParams(dimension_semantics=("parallel",)),
    )(x, mask_f, packed["gvec"], packed["lvec"],
      packed["wqkv"], packed["wo"], packed["w1"], packed["w2"],
      packed["pool_w"], packed["cls_w"])
    return out[:, 0, :NUM_LABELS]


def pack_params(params):
    """One-time offline re-pack: lane-pad to 128, fuse Q/K/V, bundle tiny vectors, bf16 weights."""
    f32, bf16 = jnp.float32, jnp.bfloat16

    def pad_cols(a, width):
        a = jnp.asarray(a, f32)
        return jnp.zeros(a.shape[:-1] + (width,), f32).at[..., :a.shape[-1]].set(a)

    def pad2(a, rows, cols):
        a = jnp.asarray(a, f32)
        return jnp.zeros((rows, cols), f32).at[:a.shape[0], :a.shape[1]].set(a)

    def lvec_rows(lp):
        rows = [jnp.concatenate([lp["bq"], lp["bk"], lp["bv"]]),     # (96,)
                lp["bo"], lp["ln1_g"], lp["ln1_b"],
                lp["b1"], lp["b2"], lp["ln2_g"], lp["ln2_b"]]
        return jnp.stack([pad_cols(r, HP) for r in rows])            # (8, HP)

    layers = params["layers"]
    return {
        "word_emb": pad_cols(params["word_emb"], HP),
        "pos_emb": pad_cols(params["pos_emb"], HP),
        "type_emb": pad_cols(params["type_emb"], HP),
        # gamma/beta pads are ZERO so padded lanes stay exactly zero through every LN.
        "gvec": jnp.stack([pad_cols(params["emb_ln_g"], HP),
                           pad_cols(params["emb_ln_b"], HP),
                           pad_cols(params["pooler_b"], HP),
                           pad_cols(params["cls_b"], CLS_PAD)]),      # (4, HP)
        "lvec": jnp.stack([lvec_rows(lp) for lp in layers]),          # (L, 8, HP)
        "wqkv": jnp.stack([pad2(jnp.concatenate([lp["wq"], lp["wk"], lp["wv"]], axis=1),
                                HP, 3 * HIDDEN) for lp in layers]).astype(bf16),
        "wo": jnp.stack([pad2(lp["wo"], HP, HP) for lp in layers]).astype(bf16),
        "w1": jnp.stack([pad2(lp["w1"], HP, IP) for lp in layers]).astype(bf16),
        "w2": jnp.stack([pad2(lp["w2"], IP, HP) for lp in layers]).astype(bf16),
        "pool_w": pad2(params["pooler_w"], HP, HP).astype(bf16),
        "cls_w": pad2(params["cls_w"], HP, CLS_PAD).astype(bf16),
    }


def init_params(key):
    keys = iter(jax.random.split(key, 256))

    def nrm(shape):
        return 0.02 * jax.random.normal(next(keys), shape, dtype=jnp.float32)

    params = {
        "word_emb": nrm((VOCAB, HIDDEN)),
        "pos_emb": nrm((MAX_POS, HIDDEN)),
        "type_emb": nrm((TYPE_VOCAB, HIDDEN)),
        "emb_ln_g": jnp.ones((HIDDEN,), jnp.float32),
        "emb_ln_b": jnp.zeros((HIDDEN,), jnp.float32),
        "layers": [],
        "pooler_w": nrm((HIDDEN, HIDDEN)),
        "pooler_b": jnp.zeros((HIDDEN,), jnp.float32),
        "cls_w": nrm((HIDDEN, NUM_LABELS)),
        "cls_b": jnp.zeros((NUM_LABELS,), jnp.float32),
    }
    for _ in range(NUM_LAYERS):
        params["layers"].append({
            "wq": nrm((HIDDEN, HIDDEN)), "bq": jnp.zeros((HIDDEN,), jnp.float32),
            "wk": nrm((HIDDEN, HIDDEN)), "bk": jnp.zeros((HIDDEN,), jnp.float32),
            "wv": nrm((HIDDEN, HIDDEN)), "bv": jnp.zeros((HIDDEN,), jnp.float32),
            "wo": nrm((HIDDEN, HIDDEN)), "bo": jnp.zeros((HIDDEN,), jnp.float32),
            "ln1_g": jnp.ones((HIDDEN,), jnp.float32),
            "ln1_b": jnp.zeros((HIDDEN,), jnp.float32),
            "w1": nrm((HIDDEN, INTERMEDIATE)), "b1": jnp.zeros((INTERMEDIATE,), jnp.float32),
            "w2": nrm((INTERMEDIATE, HIDDEN)), "b2": jnp.zeros((HIDDEN,), jnp.float32),
            "ln2_g": jnp.ones((HIDDEN,), jnp.float32),
            "ln2_b": jnp.zeros((HIDDEN,), jnp.float32),
        })
    return params


if __name__ == "__main__":
    B, S = 2, 8
    key = jax.random.PRNGKey(0)
    pkey, ikey = jax.random.split(key)
    params = init_params(pkey)
    packed = jax.tree_util.tree_map(jax.block_until_ready, pack_params(params))

    ids = jax.random.randint(ikey, (B, S), 0, VOCAB, dtype=jnp.int32)
    mask = jnp.array([[1] * S, [1] * (S - 2) + [0, 0]], dtype=jnp.int32)
    token_type_ids = jnp.concatenate(
        [jnp.zeros((B, S // 2), jnp.int32), jnp.ones((B, S // 2), jnp.int32)], axis=1)

    logits = jax.jit(bert_class_forward)(packed, ids, mask, token_type_ids)
    jax.block_until_ready(logits)
    assert logits.shape == (B, NUM_LABELS) and logits.dtype == jnp.float32
    print("KERNEL_OK")
</pallas_src>

<mosaic_0001>
module attributes {stable_mosaic.version = 11 : i64} {
  func.func @_bert_fused_kernel(%arg0: i32, %arg1: memref<1x8x128xf32, #tpu.memory_space<vmem>>, %arg2: memref<1x1x8xf32, #tpu.memory_space<vmem>>, %arg3: memref<4x128xf32, #tpu.memory_space<vmem>>, %arg4: memref<2x8x128xf32, #tpu.memory_space<vmem>>, %arg5: memref<2x128x96xbf16, #tpu.memory_space<vmem>>, %arg6: memref<2x128x128xbf16, #tpu.memory_space<vmem>>, %arg7: memref<2x128x128xbf16, #tpu.memory_space<vmem>>, %arg8: memref<2x128x128xbf16, #tpu.memory_space<vmem>>, %arg9: memref<128x128xbf16, #tpu.memory_space<vmem>>, %arg10: memref<128x128xbf16, #tpu.memory_space<vmem>>, %arg11: memref<1x1x128xf32, #tpu.memory_space<vmem>>, %arg12: memref<8x128xf32, #tpu.memory_space<vmem>>) attributes {dimension_semantics = [#tpu.dimension_semantics<parallel>], iteration_bounds = array<i64: 2>, scalar_prefetch = 0 : i64, scratch_operands = 1 : i64, tpu.core_type = #tpu.core_type<tc>, window_params = [{transform_indices = @transform_0, window_bounds = array<i64: 1, 8, 128>}, {transform_indices = @transform_1, window_bounds = array<i64: 1, 1, 8>}, {pipeline_mode = #tpu.pipeline_mode<synchronous>, transform_indices = @transform_2, window_bounds = array<i64: 4, 128>}, {pipeline_mode = #tpu.pipeline_mode<synchronous>, transform_indices = @transform_3, window_bounds = array<i64: 2, 8, 128>}, {pipeline_mode = #tpu.pipeline_mode<synchronous>, transform_indices = @transform_4, window_bounds = array<i64: 2, 128, 96>}, {pipeline_mode = #tpu.pipeline_mode<synchronous>, transform_indices = @transform_5, window_bounds = array<i64: 2, 128, 128>}, {pipeline_mode = #tpu.pipeline_mode<synchronous>, transform_indices = @transform_6, window_bounds = array<i64: 2, 128, 128>}, {pipeline_mode = #tpu.pipeline_mode<synchronous>, transform_indices = @transform_7, window_bounds = array<i64: 2, 128, 128>}, {pipeline_mode = #tpu.pipeline_mode<synchronous>, transform_indices = @transform_8, window_bounds = array<i64: 128, 128>}, {pipeline_mode = #tpu.pipeline_mode<synchronous>, transform_indices = @transform_9, window_bounds = array<i64: 128, 128>}, {transform_indices = @transform_10, window_bounds = array<i64: 1, 1, 128>}]} {
    %0 = tpu.iota {dimensions = array<i32: 1>} : vector<1x128xi32>
    %c32_i32 = arith.constant 32 : i32
    %1 = vector.broadcast %c32_i32 : i32 to vector<1x128xi32>
    %2 = arith.cmpi slt, %0, %1 : vector<1x128xi32>
    %3 = arith.extui %2 : vector<1x128xi1> to vector<1x128xi32>
    %4 = arith.sitofp %3 : vector<1x128xi32> to vector<1x128xf32>
    %c0 = arith.constant 0 : index
    %c0_0 = arith.constant 0 : index
    %5 = vector.load %arg3[%c0, %c0_0] : memref<4x128xf32, #tpu.memory_space<vmem>>, vector<4x128xf32>
    %6 = vector.extract_strided_slice %5 {offsets = [0, 0], sizes = [1, 128], strides = [1, 1]} : vector<4x128xf32> to vector<1x128xf32>
    %7 = vector.extract_strided_slice %5 {offsets = [1, 0], sizes = [1, 128], strides = [1, 1]} : vector<4x128xf32> to vector<1x128xf32>
    %8 = vector.extract_strided_slice %5 {offsets = [2, 0], sizes = [1, 128], strides = [1, 1]} : vector<4x128xf32> to vector<1x128xf32>
    %9 = vector.extract_strided_slice %5 {offsets = [3, 0], sizes = [1, 128], strides = [1, 1]} : vector<4x128xf32> to vector<1x128xf32>
    %c0_1 = arith.constant 0 : index
    %c0_2 = arith.constant 0 : index
    %c0_3 = arith.constant 0 : index
    %10 = vector.load %arg1[%c0_1, %c0_2, %c0_3] : memref<1x8x128xf32, #tpu.memory_space<vmem>>, vector<1x8x128xf32>
    %11 = vector.shape_cast %10 : vector<1x8x128xf32> to vector<8x128xf32>
    %cst = arith.constant dense<0.000000e+00> : vector<8xf32>
    %12 = vector.multi_reduction <add>, %11, %cst [1] : vector<8x128xf32> to vector<8xf32>
    %13 = vector.shape_cast %12 : vector<8xf32> to vector<8x1xf32>
    %cst_4 = arith.constant 3.125000e-02 : f32
    %14 = vector.broadcast %cst_4 : f32 to vector<8x1xf32>
    %15 = arith.mulf %13, %14 : vector<8x1xf32>
    %16 = vector.broadcast %15 : vector<8x1xf32> to vector<8x128xf32>
    %17 = arith.subf %11, %16 : vector<8x128xf32>
    %18 = vector.broadcast %4 : vector<1x128xf32> to vector<8x128xf32>
    %19 = arith.mulf %17, %18 : vector<8x128xf32>
    %20 = arith.mulf %19, %19 : vector<8x128xf32>
    %cst_5 = arith.constant dense<0.000000e+00> : vector<8xf32>
    %21 = vector.multi_reduction <add>, %20, %cst_5 [1] : vector<8x128xf32> to vector<8xf32>
    %22 = vector.shape_cast %21 : vector<8xf32> to vector<8x1xf32>
    %cst_6 = arith.constant 3.125000e-02 : f32
    %23 = vector.broadcast %cst_6 : f32 to vector<8x1xf32>
    %24 = arith.mulf %22, %23 : vector<8x1xf32>
    %cst_7 = arith.constant 9.99999996E-13 : f32
    %25 = vector.broadcast %cst_7 : f32 to vector<8x1xf32>
    %26 = arith.addf %24, %25 : vector<8x1xf32>
    %27 = math.rsqrt %26 : vector<8x1xf32>
    %28 = vector.broadcast %27 : vector<8x1xf32> to vector<8x128xf32>
    %29 = arith.mulf %19, %28 : vector<8x128xf32>
    %30 = vector.broadcast %6 : vector<1x128xf32> to vector<8x128xf32>
    %31 = arith.mulf %29, %30 : vector<8x128xf32>
    %32 = vector.broadcast %7 : vector<1x128xf32> to vector<8x128xf32>
    %33 = arith.addf %31, %32 : vector<8x128xf32>
    %c0_8 = arith.constant 0 : index
    %c0_9 = arith.constant 0 : index
    %c0_10 = arith.constant 0 : index
    %34 = vector.load %arg2[%c0_8, %c0_9, %c0_10] : memref<1x1x8xf32, #tpu.memory_space<vmem>>, vector<1x1x8xf32>
    %35 = vector.shape_cast %34 : vector<1x1x8xf32> to vector<1x8xf32>
    %cst_11 = arith.constant 1.000000e+00 : f32
    %36 = vector.broadcast %cst_11 : f32 to vector<1x8xf32>
    %37 = arith.subf %36, %35 : vector<1x8xf32>
    %cst_12 = arith.constant -1.000000e+09 : f32
    %38 = vector.broadcast %cst_12 : f32 to vector<1x8xf32>
    %39 = arith.mulf %37, %38 : vector<1x8xf32>
    %40 = vector.shape_cast %39 : vector<1x8xf32> to vector<1x1x8xf32>
    %41 = vector.shape_cast %40 : vector<1x1x8xf32> to vector<1x1x8xf32>
    %42 = vector.broadcast %41 : vector<1x1x8xf32> to vector<2x8x8xf32>
    %cst_13 = arith.constant 0.000000e+00 : f32
    %43 = vector.broadcast %cst_13 : f32 to vector<8x128xf32>
    %c0_14 = arith.constant 0 : index
    %c0_15 = arith.constant 0 : index
    %44 = vector.load %arg12[%c0_14, %c0_15] : memref<8x128xf32, #tpu.memory_space<vmem>>, vector<8x128xf32>
    tpu.vector_store %arg12[%c0_14, %c0_15], %43 {strides = array<i32>} : memref<8x128xf32, #tpu.memory_space<vmem>>, vector<8x128xf32>,
    %c0_16 = arith.constant 0 : index
    %c0_17 = arith.constant 0 : index
    %c0_18 = arith.constant 0 : index
    %45 = vector.load %arg4[%c0_16, %c0_17, %c0_18] : memref<2x8x128xf32, #tpu.memory_space<vmem>>, vector<1x8x128xf32>
    %46 = vector.shape_cast %45 : vector<1x8x128xf32> to vector<8x128xf32>
    %47 = vector.extract_strided_slice %46 {offsets = [0, 0], sizes = [1, 96], strides = [1, 1]} : vector<8x128xf32> to vector<1x96xf32>
    %48 = vector.extract_strided_slice %46 {offsets = [1, 0], sizes = [1, 128], strides = [1, 1]} : vector<8x128xf32> to vector<1x128xf32>
    %49 = vector.extract_strided_slice %46 {offsets = [2, 0], sizes = [1, 128], strides = [1, 1]} : vector<8x128xf32> to vector<1x128xf32>
    %50 = vector.extract_strided_slice %46 {offsets = [3, 0], sizes = [1, 128], strides = [1, 1]} : vector<8x128xf32> to vector<1x128xf32>
    %51 = vector.extract_strided_slice %46 {offsets = [4, 0], sizes = [1, 128], strides = [1, 1]} : vector<8x128xf32> to vector<1x128xf32>
    %52 = vector.extract_strided_slice %46 {offsets = [5, 0], sizes = [1, 128], strides = [1, 1]} : vector<8x128xf32> to vector<1x128xf32>
    %53 = vector.extract_strided_slice %46 {offsets = [6, 0], sizes = [1, 128], strides = [1, 1]} : vector<8x128xf32> to vector<1x128xf32>
    %54 = vector.extract_strided_slice %46 {offsets = [7, 0], sizes = [1, 128], strides = [1, 1]} : vector<8x128xf32> to vector<1x128xf32>
    %55 = arith.truncf %33 : vector<8x128xf32> to vector<8x128xbf16>
    %c0_19 = arith.constant 0 : index
    %c0_20 = arith.constant 0 : index
    %c0_21 = arith.constant 0 : index
    %56 = vector.load %arg5[%c0_19, %c0_20, %c0_21] : memref<2x128x96xbf16, #tpu.memory_space<vmem>>, vector<1x128x96xbf16>
    %57 = vector.shape_cast %56 : vector<1x128x96xbf16> to vector<128x96xbf16>
    %cst_22 = arith.constant dense<0.000000e+00> : vector<8x96xf32>
    %58 = tpu.matmul %55, %57, %cst_22 {dimension_numbers = #tpu.dot_dimension_numbers<[1], [0], [0], [1], [0, 0, 1, 1], [], []>} : vector<8x128xbf16>, vector<128x96xbf16>, vector<8x96xf32> -> vector<8x96xf32>
    %59 = vector.broadcast %47 : vector<1x96xf32> to vector<8x96xf32>
    %60 = arith.addf %58, %59 : vector<8x96xf32>
    %61 = vector.extract_strided_slice %60 {offsets = [0, 0], sizes = [8, 16], strides = [1, 1]} : vector<8x96xf32> to vector<8x16xf32>
    %62 = vector.extract_strided_slice %60 {offsets = [0, 16], sizes = [8, 16], strides = [1, 1]} : vector<8x96xf32> to vector<8x16xf32>
    %63 = vector.shape_cast %61 : vector<8x16xf32> to vector<1x8x16xf32>
    %64 = vector.shape_cast %62 : vector<8x16xf32> to vector<1x8x16xf32>
    %65 = tpu.concatenate %63, %64 in 0 : vector<1x8x16xf32>, vector<1x8x16xf32> -> vector<2x8x16xf32>
    %66 = vector.extract_strided_slice %60 {offsets = [0, 32], sizes = [8, 16], strides = [1, 1]} : vector<8x96xf32> to vector<8x16xf32>
    %67 = vector.extract_strided_slice %60 {offsets = [0, 48], sizes = [8, 16], strides = [1, 1]} : vector<8x96xf32> to vector<8x16xf32>
    %68 = vector.shape_cast %66 : vector<8x16xf32> to vector<1x8x16xf32>
    %69 = vector.shape_cast %67 : vector<8x16xf32> to vector<1x8x16xf32>
    %70 = tpu.concatenate %68, %69 in 0 : vector<1x8x16xf32>, vector<1x8x16xf32> -> vector<2x8x16xf32>
    %71 = vector.extract_strided_slice %60 {offsets = [0, 64], sizes = [8, 16], strides = [1, 1]} : vector<8x96xf32> to vector<8x16xf32>
    %72 = vector.extract_strided_slice %60 {offsets = [0, 80], sizes = [8, 16], strides = [1, 1]} : vector<8x96xf32> to vector<8x16xf32>
    %73 = vector.shape_cast %71 : vector<8x16xf32> to vector<1x8x16xf32>
    %74 = vector.shape_cast %72 : vector<8x16xf32> to vector<1x8x16xf32>
    %75 = tpu.concatenate %73, %74 in 0 : vector<1x8x16xf32>, vector<1x8x16xf32> -> vector<2x8x16xf32>
    %76 = arith.truncf %65 : vector<2x8x16xf32> to vector<2x8x16xbf16>
    %77 = arith.truncf %70 : vector<2x8x16xf32> to vector<2x8x16xbf16>
    "tpu.trace_start"() <{level = 10 : i32, message = "hqd,hkd->hqk"}> : () -> ()
    %cst_23 = arith.constant dense<0.000000e+00> : vector<2x8x8xf32>
    %78 = tpu.matmul %76, %77, %cst_23 {dimension_numbers = #tpu.dot_dimension_numbers<[2], [2], [1], [1], [0, 0, 0, 1, 1, 1], [0], [0]>} : vector<2x8x16xbf16>, vector<2x8x16xbf16>, vector<2x8x8xf32> -> vector<2x8x8xf32>
    "tpu.trace_stop"() : () -> ()
    %cst_24 = arith.constant 2.500000e-01 : f32
    %79 = vector.broadcast %cst_24 : f32 to vector<2x8x8xf32>
    %80 = arith.mulf %78, %79 : vector<2x8x8xf32>
    %81 = arith.addf %80, %42 : vector<2x8x8xf32>
    %cst_25 = arith.constant dense<0xFF800000> : vector<2x8xf32>
    %82 = vector.multi_reduction <maximumf>, %81, %cst_25 [2] : vector<2x8x8xf32> to vector<2x8xf32>
    %83 = vector.shape_cast %82 : vector<2x8xf32> to vector<2x8x1xf32>
    %84 = vector.broadcast %83 : vector<2x8x1xf32> to vector<2x8x8xf32>
    %85 = arith.subf %81, %84 : vector<2x8x8xf32>
    %86 = math.exp %85 : vector<2x8x8xf32>
    %cst_26 = arith.constant dense<0.000000e+00> : vector<2x8xf32>
    %87 = vector.multi_reduction <add>, %86, %cst_26 [2] : vector<2x8x8xf32> to vector<2x8xf32>
    %88 = vector.shape_cast %87 : vector<2x8xf32> to vector<2x8x1xf32>
    %89 = tpu.reciprocal %88 {approx = true} : vector<2x8x1xf32> -> vector<2x8x1xf32>
    %90 = vector.broadcast %89 : vector<2x8x1xf32> to vector<2x8x8xf32>
    %91 = arith.mulf %86, %90 : vector<2x8x8xf32>
    %92 = arith.truncf %91 : vector<2x8x8xf32> to vector<2x8x8xbf16>
    %93 = arith.truncf %75 : vector<2x8x16xf32> to vector<2x8x16xbf16>
    "tpu.trace_start"() <{level = 10 : i32, message = "hqk,hkd->hqd"}> : () -> ()
    %cst_27 = arith.constant dense<0.000000e+00> : vector<2x8x16xf32>
    %94 = tpu.matmul %92, %93, %cst_27 {dimension_numbers = #tpu.dot_dimension_numbers<[2], [1], [1], [2], [0, 0, 0, 1, 1, 2], [0], [0]>} : vector<2x8x8xbf16>, vector<2x8x16xbf16>, vector<2x8x16xf32> -> vector<2x8x16xf32>
    "tpu.trace_stop"() : () -> ()
    %95 = vector.extract_strided_slice %94 {offsets = [0, 0, 0], sizes = [1, 8, 16], strides = [1, 1, 1]} : vector<2x8x16xf32> to vector<1x8x16xf32>
    %96 = vector.shape_cast %95 : vector<1x8x16xf32> to vector<8x16xf32>
    %c0_28 = arith.constant 0 : index
    %c0_29 = arith.constant 0 : index
    %97 = vector.load %arg12[%c0_28, %c0_29] : memref<8x128xf32, #tpu.memory_space<vmem>>, vector<8x16xf32>
    tpu.vector_store %arg12[%c0_28, %c0_29], %96 {strides = array<i32>} : memref<8x128xf32, #tpu.memory_space<vmem>>, vector<8x16xf32>,
    %98 = vector.extract_strided_slice %94 {offsets = [1, 0, 0], sizes = [1, 8, 16], strides = [1, 1, 1]} : vector<2x8x16xf32> to vector<1x8x16xf32>
    %99 = vector.shape_cast %98 : vector<1x8x16xf32> to vector<8x16xf32>
    %c0_30 = arith.constant 0 : index
    %c16 = arith.constant 16 : index
    %100 = vector.load %arg12[%c0_30, %c16] : memref<8x128xf32, #tpu.memory_space<vmem>>, vector<8x16xf32>
    tpu.vector_store %arg12[%c0_30, %c16], %99 {strides = array<i32>} : memref<8x128xf32, #tpu.memory_space<vmem>>, vector<8x16xf32>,
    %c0_31 = arith.constant 0 : index
    %c0_32 = arith.constant 0 : index
    %101 = vector.load %arg12[%c0_31, %c0_32] : memref<8x128xf32, #tpu.memory_space<vmem>>, vector<8x128xf32>
    %102 = arith.truncf %101 : vector<8x128xf32> to vector<8x128xbf16>
    %c0_33 = arith.constant 0 : index
    %c0_34 = arith.constant 0 : index
    %c0_35 = arith.constant 0 : index
    %103 = vector.load %arg6[%c0_33, %c0_34, %c0_35] : memref<2x128x128xbf16, #tpu.memory_space<vmem>>, vector<1x128x128xbf16>
    %104 = vector.shape_cast %103 : vector<1x128x128xbf16> to vector<128x128xbf16>
    %cst_36 = arith.constant dense<0.000000e+00> : vector<8x128xf32>
    %105 = tpu.matmul %102, %104, %cst_36 {dimension_numbers = #tpu.dot_dimension_numbers<[1], [0], [0], [1], [0, 0, 1, 1], [], []>} : vector<8x128xbf16>, vector<128x128xbf16>, vector<8x128xf32> -> vector<8x128xf32>
    %106 = vector.broadcast %48 : vector<1x128xf32> to vector<8x128xf32>
    %107 = arith.addf %105, %106 : vector<8x128xf32>
    %108 = arith.addf %107, %33 : vector<8x128xf32>
    %cst_37 = arith.constant dense<0.000000e+00> : vector<8xf32>
    %109 = vector.multi_reduction <add>, %108, %cst_37 [1] : vector<8x128xf32> to vector<8xf32>
    %110 = vector.shape_cast %109 : vector<8xf32> to vector<8x1xf32>
    %cst_38 = arith.constant 3.125000e-02 : f32
    %111 = vector.broadcast %cst_38 : f32 to vector<8x1xf32>
    %112 = arith.mulf %110, %111 : vector<8x1xf32>
    %113 = vector.broadcast %112 : vector<8x1xf32> to vector<8x128xf32>
    %114 = arith.subf %108, %113 : vector<8x128xf32>
    %115 = vector.broadcast %4 : vector<1x128xf32> to vector<8x128xf32>
    %116 = arith.mulf %114, %115 : vector<8x128xf32>
    %117 = arith.mulf %116, %116 : vector<8x128xf32>
    %cst_39 = arith.constant dense<0.000000e+00> : vector<8xf32>
    %118 = vector.multi_reduction <add>, %117, %cst_39 [1] : vector<8x128xf32> to vector<8xf32>
    %119 = vector.shape_cast %118 : vector<8xf32> to vector<8x1xf32>
    %cst_40 = arith.constant 3.125000e-02 : f32
    %120 = vector.broadcast %cst_40 : f32 to vector<8x1xf32>
    %121 = arith.mulf %119, %120 : vector<8x1xf32>
    %cst_41 = arith.constant 9.99999996E-13 : f32
    %122 = vector.broadcast %cst_41 : f32 to vector<8x1xf32>
    %123 = arith.addf %121, %122 : vector<8x1xf32>
    %124 = math.rsqrt %123 : vector<8x1xf32>
    %125 = vector.broadcast %124 : vector<8x1xf32> to vector<8x128xf32>
    %126 = arith.mulf %116, %125 : vector<8x128xf32>
    %127 = vector.broadcast %49 : vector<1x128xf32> to vector<8x128xf32>
    %128 = arith.mulf %126, %127 : vector<8x128xf32>
    %129 = vector.broadcast %50 : vector<1x128xf32> to vector<8x128xf32>
    %130 = arith.addf %128, %129 : vector<8x128xf32>
    %131 = arith.truncf %130 : vector<8x128xf32> to vector<8x128xbf16>
    %c0_42 = arith.constant 0 : index
    %c0_43 = arith.constant 0 : index
    %c0_44 = arith.constant 0 : index
    %132 = vector.load %arg7[%c0_42, %c0_43, %c0_44] : memref<2x128x128xbf16, #tpu.memory_space<vmem>>, vector<1x128x128xbf16>
    %133 = vector.shape_cast %132 : vector<1x128x128xbf16> to vector<128x128xbf16>
    %cst_45 = arith.constant dense<0.000000e+00> : vector<8x128xf32>
    %134 = tpu.matmul %131, %133, %cst_45 {dimension_numbers = #tpu.dot_dimension_numbers<[1], [0], [0], [1], [0, 0, 1, 1], [], []>} : vector<8x128xbf16>, vector<128x128xbf16>, vector<8x128xf32> -> vector<8x128xf32>
    %135 = vector.broadcast %51 : vector<1x128xf32> to vector<8x128xf32>
    %136 = arith.addf %134, %135 : vector<8x128xf32>
    %137 = arith.mulf %136, %136 : vector<8x128xf32>
    %138 = arith.mulf %136, %137 : vector<8x128xf32>
    %cst_46 = arith.constant 4.471500e-02 : f32
    %139 = vector.broadcast %cst_46 : f32 to vector<8x128xf32>
    %140 = arith.mulf %139, %138 : vector<8x128xf32>
    %141 = arith.addf %136, %140 : vector<8x128xf32>
    %cst_47 = arith.constant 0.797884583 : f32
    %142 = vector.broadcast %cst_47 : f32 to vector<8x128xf32>
    %143 = arith.mulf %142, %141 : vector<8x128xf32>
    %144 = math.tanh %143 : vector<8x128xf32>
    %cst_48 = arith.constant 1.000000e+00 : f32
    %145 = vector.broadcast %cst_48 : f32 to vector<8x128xf32>
    %146 = arith.addf %145, %144 : vector<8x128xf32>
    %cst_49 = arith.constant 5.000000e-01 : f32
    %147 = vector.broadcast %cst_49 : f32 to vector<8x128xf32>
    %148 = arith.mulf %147, %146 : vector<8x128xf32>
    %149 = arith.mulf %136, %148 : vector<8x128xf32>
    %150 = arith.truncf %149 : vector<8x128xf32> to vector<8x128xbf16>
    %c0_50 = arith.constant 0 : index
    %c0_51 = arith.constant 0 : index
    %c0_52 = arith.constant 0 : index
    %151 = vector.load %arg8[%c0_50, %c0_51, %c0_52] : memref<2x128x128xbf16, #tpu.memory_space<vmem>>, vector<1x128x128xbf16>
    %152 = vector.shape_cast %151 : vector<1x128x128xbf16> to vector<128x128xbf16>
    %cst_53 = arith.constant dense<0.000000e+00> : vector<8x128xf32>
    %153 = tpu.matmul %150, %152, %cst_53 {dimension_numbers = #tpu.dot_dimension_numbers<[1], [0], [0], [1], [0, 0, 1, 1], [], []>} : vector<8x128xbf16>, vector<128x128xbf16>, vector<8x128xf32> -> vector<8x128xf32>
    %154 = vector.broadcast %52 : vector<1x128xf32> to vector<8x128xf32>
    %155 = arith.addf %153, %154 : vector<8x128xf32>
    %156 = arith.addf %155, %130 : vector<8x128xf32>
    %cst_54 = arith.constant dense<0.000000e+00> : vector<8xf32>
    %157 = vector.multi_reduction <add>, %156, %cst_54 [1] : vector<8x128xf32> to vector<8xf32>
    %158 = vector.shape_cast %157 : vector<8xf32> to vector<8x1xf32>
    %cst_55 = arith.constant 3.125000e-02 : f32
    %159 = vector.broadcast %cst_55 : f32 to vector<8x1xf32>
    %160 = arith.mulf %158, %159 : vector<8x1xf32>
    %161 = vector.broadcast %160 : vector<8x1xf32> to vector<8x128xf32>
    %162 = arith.subf %156, %161 : vector<8x128xf32>
    %163 = vector.broadcast %4 : vector<1x128xf32> to vector<8x128xf32>
    %164 = arith.mulf %162, %163 : vector<8x128xf32>
    %165 = arith.mulf %164, %164 : vector<8x128xf32>
    %cst_56 = arith.constant dense<0.000000e+00> : vector<8xf32>
    %166 = vector.multi_reduction <add>, %165, %cst_56 [1] : vector<8x128xf32> to vector<8xf32>
    %167 = vector.shape_cast %166 : vector<8xf32> to vector<8x1xf32>
    %cst_57 = arith.constant 3.125000e-02 : f32
    %168 = vector.broadcast %cst_57 : f32 to vector<8x1xf32>
    %169 = arith.mulf %167, %168 : vector<8x1xf32>
    %cst_58 = arith.constant 9.99999996E-13 : f32
    %170 = vector.broadcast %cst_58 : f32 to vector<8x1xf32>
    %171 = arith.addf %169, %170 : vector<8x1xf32>
    %172 = math.rsqrt %171 : vector<8x1xf32>
    %173 = vector.broadcast %172 : vector<8x1xf32> to vector<8x128xf32>
    %174 = arith.mulf %164, %173 : vector<8x128xf32>
    %175 = vector.broadcast %53 : vector<1x128xf32> to vector<8x128xf32>
    %176 = arith.mulf %174, %175 : vector<8x128xf32>
    %177 = vector.broadcast %54 : vector<1x128xf32> to vector<8x128xf32>
    %178 = arith.addf %176, %177 : vector<8x128xf32>
    %c1 = arith.constant 1 : index
    %c0_59 = arith.constant 0 : index
    %c0_60 = arith.constant 0 : index
    %179 = vector.load %arg4[%c1, %c0_59, %c0_60] : memref<2x8x128xf32, #tpu.memory_space<vmem>>, vector<1x8x128xf32>
    %180 = vector.shape_cast %179 : vector<1x8x128xf32> to vector<8x128xf32>
    %181 = vector.extract_strided_slice %180 {offsets = [0, 0], sizes = [1, 96], strides = [1, 1]} : vector<8x128xf32> to vector<1x96xf32>
    %182 = vector.extract_strided_slice %180 {offsets = [1, 0], sizes = [1, 128], strides = [1, 1]} : vector<8x128xf32> to vector<1x128xf32>
    %183 = vector.extract_strided_slice %180 {offsets = [2, 0], sizes = [1, 128], strides = [1, 1]} : vector<8x128xf32> to vector<1x128xf32>
    %184 = vector.extract_strided_slice %180 {offsets = [3, 0], sizes = [1, 128], strides = [1, 1]} : vector<8x128xf32> to vector<1x128xf32>
    %185 = vector.extract_strided_slice %180 {offsets = [4, 0], sizes = [1, 128], strides = [1, 1]} : vector<8x128xf32> to vector<1x128xf32>
    %186 = vector.extract_strided_slice %180 {offsets = [5, 0], sizes = [1, 128], strides = [1, 1]} : vector<8x128xf32> to vector<1x128xf32>
    %187 = vector.extract_strided_slice %180 {offsets = [6, 0], sizes = [1, 128], strides = [1, 1]} : vector<8x128xf32> to vector<1x128xf32>
    %188 = vector.extract_strided_slice %180 {offsets = [7, 0], sizes = [1, 128], strides = [1, 1]} : vector<8x128xf32> to vector<1x128xf32>
    %189 = arith.truncf %178 : vector<8x128xf32> to vector<8x128xbf16>
    %c1_61 = arith.constant 1 : index
    %c0_62 = arith.constant 0 : index
    %c0_63 = arith.constant 0 : index
    %190 = vector.load %arg5[%c1_61, %c0_62, %c0_63] : memref<2x128x96xbf16, #tpu.memory_space<vmem>>, vector<1x128x96xbf16>
    %191 = vector.shape_cast %190 : vector<1x128x96xbf16> to vector<128x96xbf16>
    %cst_64 = arith.constant dense<0.000000e+00> : vector<8x96xf32>
    %192 = tpu.matmul %189, %191, %cst_64 {dimension_numbers = #tpu.dot_dimension_numbers<[1], [0], [0], [1], [0, 0, 1, 1], [], []>} : vector<8x128xbf16>, vector<128x96xbf16>, vector<8x96xf32> -> vector<8x96xf32>
    %193 = vector.broadcast %181 : vector<1x96xf32> to vector<8x96xf32>
    %194 = arith.addf %192, %193 : vector<8x96xf32>
    %195 = vector.extract_strided_slice %194 {offsets = [0, 0], sizes = [8, 16], strides = [1, 1]} : vector<8x96xf32> to vector<8x16xf32>
    %196 = vector.extract_strided_slice %194 {offsets = [0, 16], sizes = [8, 16], strides = [1, 1]} : vector<8x96xf32> to vector<8x16xf32>
    %197 = vector.shape_cast %195 : vector<8x16xf32> to vector<1x8x16xf32>
    %198 = vector.shape_cast %196 : vector<8x16xf32> to vector<1x8x16xf32>
    %199 = tpu.concatenate %197, %198 in 0 : vector<1x8x16xf32>, vector<1x8x16xf32> -> vector<2x8x16xf32>
    %200 = vector.extract_strided_slice %194 {offsets = [0, 32], sizes = [8, 16], strides = [1, 1]} : vector<8x96xf32> to vector<8x16xf32>
    %201 = vector.extract_strided_slice %194 {offsets = [0, 48], sizes = [8, 16], strides = [1, 1]} : vector<8x96xf32> to vector<8x16xf32>
    %202 = vector.shape_cast %200 : vector<8x16xf32> to vector<1x8x16xf32>
    %203 = vector.shape_cast %201 : vector<8x16xf32> to vector<1x8x16xf32>
    %204 = tpu.concatenate %202, %203 in 0 : vector<1x8x16xf32>, vector<1x8x16xf32> -> vector<2x8x16xf32>
    %205 = vector.extract_strided_slice %194 {offsets = [0, 64], sizes = [8, 16], strides = [1, 1]} : vector<8x96xf32> to vector<8x16xf32>
    %206 = vector.extract_strided_slice %194 {offsets = [0, 80], sizes = [8, 16], strides = [1, 1]} : vector<8x96xf32> to vector<8x16xf32>
    %207 = vector.shape_cast %205 : vector<8x16xf32> to vector<1x8x16xf32>
    %208 = vector.shape_cast %206 : vector<8x16xf32> to vector<1x8x16xf32>
    %209 = tpu.concatenate %207, %208 in 0 : vector<1x8x16xf32>, vector<1x8x16xf32> -> vector<2x8x16xf32>
    %210 = arith.truncf %199 : vector<2x8x16xf32> to vector<2x8x16xbf16>
    %211 = arith.truncf %204 : vector<2x8x16xf32> to vector<2x8x16xbf16>
    "tpu.trace_start"() <{level = 10 : i32, message = "hqd,hkd->hqk"}> : () -> ()
    %cst_65 = arith.constant dense<0.000000e+00> : vector<2x8x8xf32>
    %212 = tpu.matmul %210, %211, %cst_65 {dimension_numbers = #tpu.dot_dimension_numbers<[2], [2], [1], [1], [0, 0, 0, 1, 1, 1], [0], [0]>} : vector<2x8x16xbf16>, vector<2x8x16xbf16>, vector<2x8x8xf32> -> vector<2x8x8xf32>
    "tpu.trace_stop"() : () -> ()
    %cst_66 = arith.constant 2.500000e-01 : f32
    %213 = vector.broadcast %cst_66 : f32 to vector<2x8x8xf32>
    %214 = arith.mulf %212, %213 : vector<2x8x8xf32>
    %215 = arith.addf %214, %42 : vector<2x8x8xf32>
    %cst_67 = arith.constant dense<0xFF800000> : vector<2x8xf32>
    %216 = vector.multi_reduction <maximumf>, %215, %cst_67 [2] : vector<2x8x8xf32> to vector<2x8xf32>
    %217 = vector.shape_cast %216 : vector<2x8xf32> to vector<2x8x1xf32>
    %218 = vector.broadcast %217 : vector<2x8x1xf32> to vector<2x8x8xf32>
    %219 = arith.subf %215, %218 : vector<2x8x8xf32>
    %220 = math.exp %219 : vector<2x8x8xf32>
    %cst_68 = arith.constant dense<0.000000e+00> : vector<2x8xf32>
    %221 = vector.multi_reduction <add>, %220, %cst_68 [2] : vector<2x8x8xf32> to vector<2x8xf32>
    %222 = vector.shape_cast %221 : vector<2x8xf32> to vector<2x8x1xf32>
    %223 = tpu.reciprocal %222 {approx = true} : vector<2x8x1xf32> -> vector<2x8x1xf32>
    %224 = vector.broadcast %223 : vector<2x8x1xf32> to vector<2x8x8xf32>
    %225 = arith.mulf %220, %224 : vector<2x8x8xf32>
    %226 = arith.truncf %225 : vector<2x8x8xf32> to vector<2x8x8xbf16>
    %227 = arith.truncf %209 : vector<2x8x16xf32> to vector<2x8x16xbf16>
    "tpu.trace_start"() <{level = 10 : i32, message = "hqk,hkd->hqd"}> : () -> ()
    %cst_69 = arith.constant dense<0.000000e+00> : vector<2x8x16xf32>
    %228 = tpu.matmul %226, %227, %cst_69 {dimension_numbers = #tpu.dot_dimension_numbers<[2], [1], [1], [2], [0, 0, 0, 1, 1, 2], [0], [0]>} : vector<2x8x8xbf16>, vector<2x8x16xbf16>, vector<2x8x16xf32> -> vector<2x8x16xf32>
    "tpu.trace_stop"() : () -> ()
    %229 = vector.extract_strided_slice %228 {offsets = [0, 0, 0], sizes = [1, 8, 16], strides = [1, 1, 1]} : vector<2x8x16xf32> to vector<1x8x16xf32>
    %230 = vector.shape_cast %229 : vector<1x8x16xf32> to vector<8x16xf32>
    %c0_70 = arith.constant 0 : index
    %c0_71 = arith.constant 0 : index
    %231 = vector.load %arg12[%c0_70, %c0_71] : memref<8x128xf32, #tpu.memory_space<vmem>>, vector<8x16xf32>
    tpu.vector_store %arg12[%c0_70, %c0_71], %230 {strides = array<i32>} : memref<8x128xf32, #tpu.memory_space<vmem>>, vector<8x16xf32>,
    %232 = vector.extract_strided_slice %228 {offsets = [1, 0, 0], sizes = [1, 8, 16], strides = [1, 1, 1]} : vector<2x8x16xf32> to vector<1x8x16xf32>
    %233 = vector.shape_cast %232 : vector<1x8x16xf32> to vector<8x16xf32>
    %c0_72 = arith.constant 0 : index
    %c16_73 = arith.constant 16 : index
    %234 = vector.load %arg12[%c0_72, %c16_73] : memref<8x128xf32, #tpu.memory_space<vmem>>, vector<8x16xf32>
    tpu.vector_store %arg12[%c0_72, %c16_73], %233 {strides = array<i32>} : memref<8x128xf32, #tpu.memory_space<vmem>>, vector<8x16xf32>,
    %c0_74 = arith.constant 0 : index
    %c0_75 = arith.constant 0 : index
    %235 = vector.load %arg12[%c0_74, %c0_75] : memref<8x128xf32, #tpu.memory_space<vmem>>, vector<8x128xf32>
    %236 = arith.truncf %235 : vector<8x128xf32> to vector<8x128xbf16>
    %c1_76 = arith.constant 1 : index
    %c0_77 = arith.constant 0 : index
    %c0_78 = arith.constant 0 : index
    %237 = vector.load %arg6[%c1_76, %c0_77, %c0_78] : memref<2x128x128xbf16, #tpu.memory_space<vmem>>, vector<1x128x128xbf16>
    %238 = vector.shape_cast %237 : vector<1x128x128xbf16> to vector<128x128xbf16>
    %cst_79 = arith.constant dense<0.000000e+00> : vector<8x128xf32>
    %239 = tpu.matmul %236, %238, %cst_79 {dimension_numbers = #tpu.dot_dimension_numbers<[1], [0], [0], [1], [0, 0, 1, 1], [], []>} : vector<8x128xbf16>, vector<128x128xbf16>, vector<8x128xf32> -> vector<8x128xf32>
    %240 = vector.broadcast %182 : vector<1x128xf32> to vector<8x128xf32>
    %241 = arith.addf %239, %240 : vector<8x128xf32>
    %242 = arith.addf %241, %178 : vector<8x128xf32>
    %cst_80 = arith.constant dense<0.000000e+00> : vector<8xf32>
    %243 = vector.multi_reduction <add>, %242, %cst_80 [1] : vector<8x128xf32> to vector<8xf32>
    %244 = vector.shape_cast %243 : vector<8xf32> to vector<8x1xf32>
    %cst_81 = arith.constant 3.125000e-02 : f32
    %245 = vector.broadcast %cst_81 : f32 to vector<8x1xf32>
    %246 = arith.mulf %244, %245 : vector<8x1xf32>
    %247 = vector.broadcast %246 : vector<8x1xf32> to vector<8x128xf32>
    %248 = arith.subf %242, %247 : vector<8x128xf32>
    %249 = vector.broadcast %4 : vector<1x128xf32> to vector<8x128xf32>
    %250 = arith.mulf %248, %249 : vector<8x128xf32>
    %251 = arith.mulf %250, %250 : vector<8x128xf32>
    %cst_82 = arith.constant dense<0.000000e+00> : vector<8xf32>
    %252 = vector.multi_reduction <add>, %251, %cst_82 [1] : vector<8x128xf32> to vector<8xf32>
    %253 = vector.shape_cast %252 : vector<8xf32> to vector<8x1xf32>
    %cst_83 = arith.constant 3.125000e-02 : f32
    %254 = vector.broadcast %cst_83 : f32 to vector<8x1xf32>
    %255 = arith.mulf %253, %254 : vector<8x1xf32>
    %cst_84 = arith.constant 9.99999996E-13 : f32
    %256 = vector.broadcast %cst_84 : f32 to vector<8x1xf32>
    %257 = arith.addf %255, %256 : vector<8x1xf32>
    %258 = math.rsqrt %257 : vector<8x1xf32>
    %259 = vector.broadcast %258 : vector<8x1xf32> to vector<8x128xf32>
    %260 = arith.mulf %250, %259 : vector<8x128xf32>
    %261 = vector.broadcast %183 : vector<1x128xf32> to vector<8x128xf32>
    %262 = arith.mulf %260, %261 : vector<8x128xf32>
    %263 = vector.broadcast %184 : vector<1x128xf32> to vector<8x128xf32>
    %264 = arith.addf %262, %263 : vector<8x128xf32>
    %265 = arith.truncf %264 : vector<8x128xf32> to vector<8x128xbf16>
    %c1_85 = arith.constant 1 : index
    %c0_86 = arith.constant 0 : index
    %c0_87 = arith.constant 0 : index
    %266 = vector.load %arg7[%c1_85, %c0_86, %c0_87] : memref<2x128x128xbf16, #tpu.memory_space<vmem>>, vector<1x128x128xbf16>
    %267 = vector.shape_cast %266 : vector<1x128x128xbf16> to vector<128x128xbf16>
    %cst_88 = arith.constant dense<0.000000e+00> : vector<8x128xf32>
    %268 = tpu.matmul %265, %267, %cst_88 {dimension_numbers = #tpu.dot_dimension_numbers<[1], [0], [0], [1], [0, 0, 1, 1], [], []>} : vector<8x128xbf16>, vector<128x128xbf16>, vector<8x128xf32> -> vector<8x128xf32>
    %269 = vector.broadcast %185 : vector<1x128xf32> to vector<8x128xf32>
    %270 = arith.addf %268, %269 : vector<8x128xf32>
    %271 = arith.mulf %270, %270 : vector<8x128xf32>
    %272 = arith.mulf %270, %271 : vector<8x128xf32>
    %cst_89 = arith.constant 4.471500e-02 : f32
    %273 = vector.broadcast %cst_89 : f32 to vector<8x128xf32>
    %274 = arith.mulf %273, %272 : vector<8x128xf32>
    %275 = arith.addf %270, %274 : vector<8x128xf32>
    %cst_90 = arith.constant 0.797884583 : f32
    %276 = vector.broadcast %cst_90 : f32 to vector<8x128xf32>
    %277 = arith.mulf %276, %275 : vector<8x128xf32>
    %278 = math.tanh %277 : vector<8x128xf32>
    %cst_91 = arith.constant 1.000000e+00 : f32
    %279 = vector.broadcast %cst_91 : f32 to vector<8x128xf32>
    %280 = arith.addf %279, %278 : vector<8x128xf32>
    %cst_92 = arith.constant 5.000000e-01 : f32
    %281 = vector.broadcast %cst_92 : f32 to vector<8x128xf32>
    %282 = arith.mulf %281, %280 : vector<8x128xf32>
    %283 = arith.mulf %270, %282 : vector<8x128xf32>
    %284 = arith.truncf %283 : vector<8x128xf32> to vector<8x128xbf16>
    %c1_93 = arith.constant 1 : index
    %c0_94 = arith.constant 0 : index
    %c0_95 = arith.constant 0 : index
    %285 = vector.load %arg8[%c1_93, %c0_94, %c0_95] : memref<2x128x128xbf16, #tpu.memory_space<vmem>>, vector<1x128x128xbf16>
    %286 = vector.shape_cast %285 : vector<1x128x128xbf16> to vector<128x128xbf16>
    %cst_96 = arith.constant dense<0.000000e+00> : vector<8x128xf32>
    %287 = tpu.matmul %284, %286, %cst_96 {dimension_numbers = #tpu.dot_dimension_numbers<[1], [0], [0], [1], [0, 0, 1, 1], [], []>} : vector<8x128xbf16>, vector<128x128xbf16>, vector<8x128xf32> -> vector<8x128xf32>
    %288 = vector.broadcast %186 : vector<1x128xf32> to vector<8x128xf32>
    %289 = arith.addf %287, %288 : vector<8x128xf32>
    %290 = arith.addf %289, %264 : vector<8x128xf32>
    %cst_97 = arith.constant dense<0.000000e+00> : vector<8xf32>
    %291 = vector.multi_reduction <add>, %290, %cst_97 [1] : vector<8x128xf32> to vector<8xf32>
    %292 = vector.shape_cast %291 : vector<8xf32> to vector<8x1xf32>
    %cst_98 = arith.constant 3.125000e-02 : f32
    %293 = vector.broadcast %cst_98 : f32 to vector<8x1xf32>
    %294 = arith.mulf %292, %293 : vector<8x1xf32>
    %295 = vector.broadcast %294 : vector<8x1xf32> to vector<8x128xf32>
    %296 = arith.subf %290, %295 : vector<8x128xf32>
    %297 = vector.broadcast %4 : vector<1x128xf32> to vector<8x128xf32>
    %298 = arith.mulf %296, %297 : vector<8x128xf32>
    %299 = arith.mulf %298, %298 : vector<8x128xf32>
    %cst_99 = arith.constant dense<0.000000e+00> : vector<8xf32>
    %300 = vector.multi_reduction <add>, %299, %cst_99 [1] : vector<8x128xf32> to vector<8xf32>
    %301 = vector.shape_cast %300 : vector<8xf32> to vector<8x1xf32>
    %cst_100 = arith.constant 3.125000e-02 : f32
    %302 = vector.broadcast %cst_100 : f32 to vector<8x1xf32>
    %303 = arith.mulf %301, %302 : vector<8x1xf32>
    %cst_101 = arith.constant 9.99999996E-13 : f32
    %304 = vector.broadcast %cst_101 : f32 to vector<8x1xf32>
    %305 = arith.addf %303, %304 : vector<8x1xf32>
    %306 = math.rsqrt %305 : vector<8x1xf32>
    %307 = vector.broadcast %306 : vector<8x1xf32> to vector<8x128xf32>
    %308 = arith.mulf %298, %307 : vector<8x128xf32>
    %309 = vector.broadcast %187 : vector<1x128xf32> to vector<8x128xf32>
    %310 = arith.mulf %308, %309 : vector<8x128xf32>
    %311 = vector.broadcast %188 : vector<1x128xf32> to vector<8x128xf32>
    %312 = arith.addf %310, %311 : vector<8x128xf32>
    %313 = vector.extract_strided_slice %312 {offsets = [0, 0], sizes = [1, 128], strides = [1, 1]} : vector<8x128xf32> to vector<1x128xf32>
    %314 = arith.truncf %313 : vector<1x128xf32> to vector<1x128xbf16>
    %c0_102 = arith.constant 0 : index
    %c0_103 = arith.constant 0 : index
    %315 = vector.load %arg9[%c0_102, %c0_103] : memref<128x128xbf16, #tpu.memory_space<vmem>>, vector<128x128xbf16>
    %cst_104 = arith.constant dense<0.000000e+00> : vector<1x128xf32>
    %316 = tpu.matmul %314, %315, %cst_104 {dimension_numbers = #tpu.dot_dimension_numbers<[1], [0], [0], [1], [0, 0, 1, 1], [], []>} : vector<1x128xbf16>, vector<128x128xbf16>, vector<1x128xf32> -> vector<1x128xf32>
    %317 = arith.addf %316, %8 : vector<1x128xf32>
    %318 = math.tanh %317 : vector<1x128xf32>
    %319 = arith.truncf %318 : vector<1x128xf32> to vector<1x128xbf16>
    %c0_105 = arith.constant 0 : index
    %c0_106 = arith.constant 0 : index
    %320 = vector.load %arg10[%c0_105, %c0_106] : memref<128x128xbf16, #tpu.memory_space<vmem>>, vector<128x128xbf16>
    %cst_107 = arith.constant dense<0.000000e+00> : vector<1x128xf32>
    %321 = tpu.matmul %319, %320, %cst_107 {dimension_numbers = #tpu.dot_dimension_numbers<[1], [0], [0], [1], [0, 0, 1, 1], [], []>} : vector<1x128xbf16>, vector<128x128xbf16>, vector<1x128xf32> -> vector<1x128xf32>
    %322 = arith.addf %321, %9 : vector<1x128xf32>
    %c0_108 = arith.constant 0 : index
    %c0_109 = arith.constant 0 : index
    %c0_110 = arith.constant 0 : index
    %323 = vector.load %arg11[%c0_108, %c0_109, %c0_110] : memref<1x1x128xf32, #tpu.memory_space<vmem>>, vector<1x1x128xf32>
    %324 = vector.shape_cast %323 : vector<1x1x128xf32> to vector<1x128xf32>
    %325 = vector.shape_cast %322 : vector<1x128xf32> to vector<1x1x128xf32>
    tpu.vector_store %arg11[%c0_108, %c0_109, %c0_110], %325 {strides = array<i32>} : memref<1x1x128xf32, #tpu.memory_space<vmem>>, vector<1x1x128xf32>,
    return
  }
  func.func @transform_0(%arg0: i32) -> (i32, i32, i32) {
    %c0_i32 = arith.constant 0 : i32
    %c0_i32_0 = arith.constant 0 : i32
    %c0_i32_1 = arith.constant 0 : i32
    return %arg0, %c0_i32, %c0_i32_0 : i32, i32, i32
  }
  func.func @transform_1(%arg0: i32) -> (i32, i32, i32) {
    %c0_i32 = arith.constant 0 : i32
    %c0_i32_0 = arith.constant 0 : i32
    %c0_i32_1 = arith.constant 0 : i32
    return %arg0, %c0_i32, %c0_i32_0 : i32, i32, i32
  }
  func.func @transform_2(%arg0: i32) -> (i32, i32) {
    %c0_i32 = arith.constant 0 : i32
    %c0_i32_0 = arith.constant 0 : i32
    %c0_i32_1 = arith.constant 0 : i32
    return %c0_i32, %c0_i32_0 : i32, i32
  }
  func.func @transform_3(%arg0: i32) -> (i32, i32, i32) {
    %c0_i32 = arith.constant 0 : i32
    %c0_i32_0 = arith.constant 0 : i32
    %c0_i32_1 = arith.constant 0 : i32
    %c0_i32_2 = arith.constant 0 : i32
    return %c0_i32, %c0_i32_0, %c0_i32_1 : i32, i32, i32
  }
  func.func @transform_4(%arg0: i32) -> (i32, i32, i32) {
    %c0_i32 = arith.constant 0 : i32
    %c0_i32_0 = arith.constant 0 : i32
    %c0_i32_1 = arith.constant 0 : i32
    %c0_i32_2 = arith.constant 0 : i32
    return %c0_i32, %c0_i32_0, %c0_i32_1 : i32, i32, i32
  }
  func.func @transform_5(%arg0: i32) -> (i32, i32, i32) {
    %c0_i32 = arith.constant 0 : i32
    %c0_i32_0 = arith.constant 0 : i32
    %c0_i32_1 = arith.constant 0 : i32
    %c0_i32_2 = arith.constant 0 : i32
    return %c0_i32, %c0_i32_0, %c0_i32_1 : i32, i32, i32
  }
  func.func @transform_6(%arg0: i32) -> (i32, i32, i32) {
    %c0_i32 = arith.constant 0 : i32
    %c0_i32_0 = arith.constant 0 : i32
    %c0_i32_1 = arith.constant 0 : i32
    %c0_i32_2 = arith.constant 0 : i32
    return %c0_i32, %c0_i32_0, %c0_i32_1 : i32, i32, i32
  }
  func.func @transform_7(%arg0: i32) -> (i32, i32, i32) {
    %c0_i32 = arith.constant 0 : i32
    %c0_i32_0 = arith.constant 0 : i32
    %c0_i32_1 = arith.constant 0 : i32
    %c0_i32_2 = arith.constant 0 : i32
    return %c0_i32, %c0_i32_0, %c0_i32_1 : i32, i32, i32
  }
  func.func @transform_8(%arg0: i32) -> (i32, i32) {
    %c0_i32 = arith.constant 0 : i32
    %c0_i32_0 = arith.constant 0 : i32
    %c0_i32_1 = arith.constant 0 : i32
    return %c0_i32, %c0_i32_0 : i32, i32
  }
  func.func @transform_9(%arg0: i32) -> (i32, i32) {
    %c0_i32 = arith.constant 0 : i32
    %c0_i32_0 = arith.constant 0 : i32
    %c0_i32_1 = arith.constant 0 : i32
    return %c0_i32, %c0_i32_0 : i32, i32
  }
  func.func @transform_10(%arg0: i32) -> (i32, i32, i32) {
    %c0_i32 = arith.constant 0 : i32
    %c0_i32_0 = arith.constant 0 : i32
    %c0_i32_1 = arith.constant 0 : i32
    return %arg0, %c0_i32, %c0_i32_0 : i32, i32, i32
  }
}

</mosaic_0001>

<llo_original>
// kernel: bert_class_forward.1
$region0: #{bert_class_forward.1}
  #allocation0 [shape = 'u32[]', space=smem, size = 0x4, offset = 0x4, fixed_abs, tag = 'smem constant byte address 0x4 - core index']
  #allocation1 [shape = 'u32[144,128]{1,0:T(1,128)}', space=vmem, size = 0x12000, scoped, tag = 'internal scratch']
  #allocation2 [shape = 'f32[8,128]{1,0:T(8,128)}', space=vmem, size = 0x1000, scoped, tag = 'scratch operand']
  %s0 = inlined_call_operand.vmem [shape: f32[2,8,128], index: 0, kind: input, shape index: {}]
  %s1 = inlined_call_operand.vmem [shape: f32[2,1,8], index: 1, kind: input, shape index: {}]
  %s2 = inlined_call_operand.vmem [shape: f32[4,128], index: 2, kind: input, shape index: {}]
  %s3 = inlined_call_operand.vmem [shape: f32[2,8,128], index: 3, kind: input, shape index: {}]
  %s4 = inlined_call_operand.vmem [shape: bf16[2,128,96], index: 4, kind: input, shape index: {}]
  %s5 = inlined_call_operand.vmem [shape: bf16[2,128,128], index: 5, kind: input, shape index: {}]
  %s6 = inlined_call_operand.vmem [shape: bf16[2,128,128], index: 6, kind: input, shape index: {}]
  %s7 = inlined_call_operand.vmem [shape: bf16[2,128,128], index: 7, kind: input, shape index: {}]
  %s8 = inlined_call_operand.vmem [shape: bf16[128,128], index: 8, kind: input, shape index: {}]
  %s9 = inlined_call_operand.vmem [shape: bf16[128,128], index: 9, kind: input, shape index: {}]
  %s10 = inlined_call_operand.hbm [shape: f32[2,1,128], index: 10, kind: output, shape index: {}]
  %s11 = sld [smem:[#allocation0]]
  $region73: #{bert_class_forward.1} parent=0
    _
  %s13 = ssub.s32 1, %s11
  %s14 = scalar_select 0, %s13, %s11
  $region1: #{bert_class_forward.1} parent=0
    #allocation3 [shape = 'u8[1024]{0}', space=vmem, size = 0x400, scoped, tag = 'output window, operand 0']
    #allocation4 [shape = 's32[2]{0}', space=sflag, size = 0x8, scoped, tag = 'scoped memory for bert_class_forward.1']
    %15 = vsyncpa [#allocation4], 0
    %s16 = scalar_lea.sflag [#allocation4], 1
    %17 = vsyncpa %s16, 0
    loop: start=0, step=1, limit=4
    $region2: #{bert_class_forward.1} parent=1 // loop_pre_header
      _
    $region3: #{bert_class_forward.1} parent=1 // loop_header
      %s19 = sphi 0, %s23
      %p20 = scmp.ge.s32.totalorder %s19, 4
      %s29 = sphi 0, %s31
      %s32 = sphi 0, %s29
      %s33 = sphi 0, %s32
      %s49 = sphi 0, %s33
      %s55 = sphi 0, %s57
      %s58 = sphi 0, %s55
      %s59 = sphi 0, %s58
      %s75 = sphi 0, %s59
      %s79 = sphi 0, %s79
      %s81 = sphi 0, %s79
      %s82 = sphi 0, %s81
      %s96 = sphi 0, %s82
      %s100 = sphi 0, %s100
      %s102 = sphi 0, %s100
      %s103 = sphi 0, %s102
      %s117 = sphi 0, %s103
      %s121 = sphi 0, %s121
      %s123 = sphi 0, %s121
      %s124 = sphi 0, %s123
      %s138 = sphi 0, %s124
      %s142 = sphi 0, %s142
      %s144 = sphi 0, %s142
      %s145 = sphi 0, %s144
      %s159 = sphi 0, %s145
      %s163 = sphi 0, %s163
      %s165 = sphi 0, %s163
      %s166 = sphi 0, %s165
      %s180 = sphi 0, %s166
      %s184 = sphi 0, %s184
      %s186 = sphi 0, %s184
      %s187 = sphi 0, %s186
      %s201 = sphi 0, %s187
      %s205 = sphi 0, %s205
      %s207 = sphi 0, %s205
      %s208 = sphi 0, %s207
      %s222 = sphi 0, %s208
      %s226 = sphi 0, %s226
      %s228 = sphi 0, %s226
      %s229 = sphi 0, %s228
      %s243 = sphi 0, %s229
      %s249 = sphi 0, %s251
      %s252 = sphi 0, %s249
      %s253 = sphi 0, %s252
      %s269 = sphi 0, %s253
    $region4: #{bert_class_forward.1} parent=1 // loop_header_branch
      %22 = sbr.rel (%p20) target = $region8
    $region5: #{bert_class_forward.1} parent=1 // loop_body
      %s24 = ssub.s32 %s19, 1
      %s25 = ssub.s32 %s19, 2
      %s26 = sadd.s32 %s19, 1
      %s27 = ssub.s32 %s19, %s26
      %p28 = scmp.eq.s32.totalorder %s27, 0
      %s30 = sadd.s32 %s29, 1
      %s31 = scalar_select %p28, %s29, %s30
      %p34 = pneg %p28
      %p35 = scmp.eq.s32.totalorder %s19, 1
      %p36 = por %p34, %p35
      %p37 = scmp.ne.s32.totalorder %s29, %s32
      %p38 = scmp.eq.s32.totalorder %s19, 0
      %p39 = por %p37, %p38
      %p40 = scmp.ne.s32.totalorder %s29, %s32
      %p41 = scmp.eq.s32.totalorder %s24, 1
      %p42 = por %p40, %p41
      %p43 = scmp.ne.s32.totalorder %s32, %s33
      %p44 = scmp.eq.s32.totalorder %s24, 0
      %p45 = por %p43, %p44
      %p46 = scmp.ne.s32.totalorder %s32, %s33
      %p47 = scmp.eq.s32.totalorder %s25, 1
      %p48 = por %p46, %p47
      %p50 = scmp.ne.s32.totalorder %s33, %s49
      %p51 = scmp.eq.s32.totalorder %s25, 0
      %p52 = por %p50, %p51
      %s53 = ssub.s32 %s19, %s26
      %p54 = scmp.eq.s32.totalorder %s53, 0
      %s56 = sadd.s32 %s55, 1
      %s57 = scalar_select %p54, %s55, %s56
      %p60 = pneg %p54
      %p61 = scmp.eq.s32.totalorder %s19, 1
      %p62 = por %p60, %p61
      %p63 = scmp.ne.s32.totalorder %s55, %s58
      %p64 = scmp.eq.s32.totalorder %s19, 0
      %p65 = por %p63, %p64
      %p66 = scmp.ne.s32.totalorder %s55, %s58
      %p67 = scmp.eq.s32.totalorder %s24, 1
      %p68 = por %p66, %p67
      %p69 = scmp.ne.s32.totalorder %s58, %s59
      %p70 = scmp.eq.s32.totalorder %s24, 0
      %p71 = por %p69, %p70
      %p72 = scmp.ne.s32.totalorder %s58, %s59
      %p73 = scmp.eq.s32.totalorder %s25, 1
      %p74 = por %p72, %p73
      %p76 = scmp.ne.s32.totalorder %s59, %s75
      %p77 = scmp.eq.s32.totalorder %s25, 0
      %p78 = por %p76, %p77
      %s80 = sadd.s32 %s79, 1
      %p83 = scmp.eq.s32.totalorder %s19, 1
      %p84 = scmp.ne.s32.totalorder %s79, %s81
      %p85 = scmp.eq.s32.totalorder %s19, 0
      %p86 = por %p84, %p85
      %p87 = scmp.ne.s32.totalorder %s79, %s81
      %p88 = scmp.eq.s32.totalorder %s24, 1
      %p89 = por %p87, %p88
      %p90 = scmp.ne.s32.totalorder %s81, %s82
      %p91 = scmp.eq.s32.totalorder %s24, 0
      %p92 = por %p90, %p91
      %p93 = scmp.ne.s32.totalorder %s81, %s82
      %p94 = scmp.eq.s32.totalorder %s25, 1
      %p95 = por %p93, %p94
      %p97 = scmp.ne.s32.totalorder %s82, %s96
      %p98 = scmp.eq.s32.totalorder %s25, 0
      %p99 = por %p97, %p98
      %s101 = sadd.s32 %s100, 1
      %p104 = scmp.eq.s32.totalorder %s19, 1
      %p105 = scmp.ne.s32.totalorder %s100, %s102
      %p106 = scmp.eq.s32.totalorder %s19, 0
      %p107 = por %p105, %p106
      %p108 = scmp.ne.s32.totalorder %s100, %s102
      %p109 = scmp.eq.s32.totalorder %s24, 1
      %p110 = por %p108, %p109
      %p111 = scmp.ne.s32.totalorder %s102, %s103
      %p112 = scmp.eq.s32.totalorder %s24, 0
      %p113 = por %p111, %p112
      %p114 = scmp.ne.s32.totalorder %s102, %s103
      %p115 = scmp.eq.s32.totalorder %s25, 1
      %p116 = por %p114, %p115
      %p118 = scmp.ne.s32.totalorder %s103, %s117
      %p119 = scmp.eq.s32.totalorder %s25, 0
      %p120 = por %p118, %p119
      %s122 = sadd.s32 %s121, 1
      %p125 = scmp.eq.s32.totalorder %s19, 1
      %p126 = scmp.ne.s32.totalorder %s121, %s123
      %p127 = scmp.eq.s32.totalorder %s19, 0
      %p128 = por %p126, %p127
      %p129 = scmp.ne.s32.totalorder %s121, %s123
      %p130 = scmp.eq.s32.totalorder %s24, 1
      %p131 = por %p129, %p130
      %p132 = scmp.ne.s32.totalorder %s123, %s124
      %p133 = scmp.eq.s32.totalorder %s24, 0
      %p134 = por %p132, %p133
      %p135 = scmp.ne.s32.totalorder %s123, %s124
      %p136 = scmp.eq.s32.totalorder %s25, 1
      %p137 = por %p135, %p136
      %p139 = scmp.ne.s32.totalorder %s124, %s138
      %p140 = scmp.eq.s32.totalorder %s25, 0
      %p141 = por %p139, %p140
      %s143 = sadd.s32 %s142, 1
      %p146 = scmp.eq.s32.totalorder %s19, 1
      %p147 = scmp.ne.s32.totalorder %s142, %s144
      %p148 = scmp.eq.s32.totalorder %s19, 0
      %p149 = por %p147, %p148
      %p150 = scmp.ne.s32.totalorder %s142, %s144
      %p151 = scmp.eq.s32.totalorder %s24, 1
      %p152 = por %p150, %p151
      %p153 = scmp.ne.s32.totalorder %s144, %s145
      %p154 = scmp.eq.s32.totalorder %s24, 0
      %p155 = por %p153, %p154
      %p156 = scmp.ne.s32.totalorder %s144, %s145
      %p157 = scmp.eq.s32.totalorder %s25, 1
      %p158 = por %p156, %p157
      %p160 = scmp.ne.s32.totalorder %s145, %s159
      %p161 = scmp.eq.s32.totalorder %s25, 0
      %p162 = por %p160, %p161
      %s164 = sadd.s32 %s163, 1
      %p167 = scmp.eq.s32.totalorder %s19, 1
      %p168 = scmp.ne.s32.totalorder %s163, %s165
      %p169 = scmp.eq.s32.totalorder %s19, 0
      %p170 = por %p168, %p169
      %p171 = scmp.ne.s32.totalorder %s163, %s165
      %p172 = scmp.eq.s32.totalorder %s24, 1
      %p173 = por %p171, %p172
      %p174 = scmp.ne.s32.totalorder %s165, %s166
      %p175 = scmp.eq.s32.totalorder %s24, 0
      %p176 = por %p174, %p175
      %p177 = scmp.ne.s32.totalorder %s165, %s166
      %p178 = scmp.eq.s32.totalorder %s25, 1
      %p179 = por %p177, %p178
      %p181 = scmp.ne.s32.totalorder %s166, %s180
      %p182 = scmp.eq.s32.totalorder %s25, 0
      %p183 = por %p181, %p182
      %s185 = sadd.s32 %s184, 1
      %p188 = scmp.eq.s32.totalorder %s19, 1
      %p189 = scmp.ne.s32.totalorder %s184, %s186
      %p190 = scmp.eq.s32.totalorder %s19, 0
      %p191 = por %p189, %p190
      %p192 = scmp.ne.s32.totalorder %s184, %s186
      %p193 = scmp.eq.s32.totalorder %s24, 1
      %p194 = por %p192, %p193
      %p195 = scmp.ne.s32.totalorder %s186, %s187
      %p196 = scmp.eq.s32.totalorder %s24, 0
      %p197 = por %p195, %p196
      %p198 = scmp.ne.s32.totalorder %s186, %s187
      %p199 = scmp.eq.s32.totalorder %s25, 1
      %p200 = por %p198, %p199
      %p202 = scmp.ne.s32.totalorder %s187, %s201
      %p203 = scmp.eq.s32.totalorder %s25, 0
      %p204 = por %p202, %p203
      %s206 = sadd.s32 %s205, 1
      %p209 = scmp.eq.s32.totalorder %s19, 1
      %p210 = scmp.ne.s32.totalorder %s205, %s207
      %p211 = scmp.eq.s32.totalorder %s19, 0
      %p212 = por %p210, %p211
      %p213 = scmp.ne.s32.totalorder %s205, %s207
      %p214 = scmp.eq.s32.totalorder %s24, 1
      %p215 = por %p213, %p214
      %p216 = scmp.ne.s32.totalorder %s207, %s208
      %p217 = scmp.eq.s32.totalorder %s24, 0
      %p218 = por %p216, %p217
      %p219 = scmp.ne.s32.totalorder %s207, %s208
      %p220 = scmp.eq.s32.totalorder %s25, 1
      %p221 = por %p219, %p220
      %p223 = scmp.ne.s32.totalorder %s208, %s222
      %p224 = scmp.eq.s32.totalorder %s25, 0
      %p225 = por %p223, %p224
      %s227 = sadd.s32 %s226, 1
      %p230 = scmp.eq.s32.totalorder %s19, 1
      %p231 = scmp.ne.s32.totalorder %s226, %s228
      %p232 = scmp.eq.s32.totalorder %s19, 0
      %p233 = por %p231, %p232
      %p234 = scmp.ne.s32.totalorder %s226, %s228
      %p235 = scmp.eq.s32.totalorder %s24, 1
      %p236 = por %p234, %p235
      %p237 = scmp.ne.s32.totalorder %s228, %s229
      %p238 = scmp.eq.s32.totalorder %s24, 0
      %p239 = por %p237, %p238
      %p240 = scmp.ne.s32.totalorder %s228, %s229
      %p241 = scmp.eq.s32.totalorder %s25, 1
      %p242 = por %p240, %p241
      %p244 = scmp.ne.s32.totalorder %s229, %s243
      %p245 = scmp.eq.s32.totalorder %s25, 0
      %p246 = por %p244, %p245
      %s247 = ssub.s32 %s19, %s26
      %p248 = scmp.eq.s32.totalorder %s247, 0
      %s250 = sadd.s32 %s249, 1
      %s251 = scalar_select %p248, %s249, %s250
      %p254 = pneg %p248
      %p255 = scmp.eq.s32.totalorder %s19, 1
      %p256 = por %p254, %p255
      %p257 = scmp.ne.s32.totalorder %s249, %s252
      %p258 = scmp.eq.s32.totalorder %s19, 0
      %p259 = por %p257, %p258
      %p260 = scmp.ne.s32.totalorder %s249, %s252
      %p261 = scmp.eq.s32.totalorder %s24, 1
      %p262 = por %p260, %p261
      %p263 = scmp.ne.s32.totalorder %s252, %s253
      %p264 = scmp.eq.s32.totalorder %s24, 0
      %p265 = por %p263, %p264
      %p266 = scmp.ne.s32.totalorder %s252, %s253
      %p267 = scmp.eq.s32.totalorder %s25, 1
      %p268 = por %p266, %p267
      %p270 = scmp.ne.s32.totalorder %s253, %s269
      %p271 = scmp.eq.s32.totalorder %s25, 0
      %p272 = por %p270, %p271
      %p273 = scmp.le.s32.totalorder 1, %s19
      %p274 = scmp.lt.s32.totalorder %s19, 3
      %p275 = pnand %p273, %p274
      %p276 = pneg %p275
      // Predicated region
      $region9: #{bert_class_forward.1} parent=5 // pred_check
        _
      $region10: #{bert_class_forward.1} parent=5 // pred_check_branch
        %278 = sbr.rel (%p275) target = $region12
      $region11: #{bert_class_forward.1} parent=5 // pred_region
        %s279 = ssub.s32 %s19, 1
        // Predicated region
        $region13: #{bert_class_forward.1} parent=11 // pred_check
          %p280 = pneg %p92
        $region14: #{bert_class_forward.1} parent=11 // pred_check_branch
          %282 = sbr.rel (%p280) target = $region16
        $region15: #{bert_class_forward.1} parent=11 // pred_region
          _
        $region16: #{bert_class_forward.1} parent=11 // pred_fallthru
          _
        // Predicated region
        $region17: #{bert_class_forward.1} parent=11 // pred_check
          %p283 = pneg %p113
        $region18: #{bert_class_forward.1} parent=11 // pred_check_branch
          %285 = sbr.rel (%p283) target = $region20
        $region19: #{bert_class_forward.1} parent=11 // pred_region
          _
        $region20: #{bert_class_forward.1} parent=11 // pred_fallthru
          _
        // Predicated region
        $region21: #{bert_class_forward.1} parent=11 // pred_check
          %p286 = pneg %p134
        $region22: #{bert_class_forward.1} parent=11 // pred_check_branch
          %288 = sbr.rel (%p286) target = $region24
        $region23: #{bert_class_forward.1} parent=11 // pred_region
          _
        $region24: #{bert_class_forward.1} parent=11 // pred_fallthru
          _
        // Predicated region
        $region25: #{bert_class_forward.1} parent=11 // pred_check
          %p289 = pneg %p155
        $region26: #{bert_class_forward.1} parent=11 // pred_check_branch
          %291 = sbr.rel (%p289) target = $region28
        $region27: #{bert_class_forward.1} parent=11 // pred_region
          _
        $region28: #{bert_class_forward.1} parent=11 // pred_fallthru
          _
        // Predicated region
        $region29: #{bert_class_forward.1} parent=11 // pred_check
          %p292 = pneg %p176
        $region30: #{bert_class_forward.1} parent=11 // pred_check_branch
          %294 = sbr.rel (%p292) target = $region32
        $region31: #{bert_class_forward.1} parent=11 // pred_region
          _
        $region32: #{bert_class_forward.1} parent=11 // pred_fallthru
          _
        // Predicated region
        $region33: #{bert_class_forward.1} parent=11 // pred_check
          %p295 = pneg %p197
        $region34: #{bert_class_forward.1} parent=11 // pred_check_branch
          %297 = sbr.rel (%p295) target = $region36
        $region35: #{bert_class_forward.1} parent=11 // pred_region
          _
        $region36: #{bert_class_forward.1} parent=11 // pred_fallthru
          _
        // Predicated region
        $region37: #{bert_class_forward.1} parent=11 // pred_check
          %p298 = pneg %p218
        $region38: #{bert_class_forward.1} parent=11 // pred_check_branch
          %300 = sbr.rel (%p298) target = $region40
        $region39: #{bert_class_forward.1} parent=11 // pred_region
          _
        $region40: #{bert_class_forward.1} parent=11 // pred_fallthru
          _
        // Predicated region
        $region41: #{bert_class_forward.1} parent=11 // pred_check
          %p301 = pneg %p239
        $region42: #{bert_class_forward.1} parent=11 // pred_check_branch
          %303 = sbr.rel (%p301) target = $region44
        $region43: #{bert_class_forward.1} parent=11 // pred_region
          _
        $region44: #{bert_class_forward.1} parent=11 // pred_fallthru
          _
      $region12: #{bert_class_forward.1} parent=5 // pred_fallthru
        _
      %p304 = scmp.lt.s32.totalorder %s19, 2
      // Predicated region
      $region45: #{bert_class_forward.1} parent=5 // pred_check
        %p305 = pneg %p304
      $region46: #{bert_class_forward.1} parent=5 // pred_check_branch
        %307 = sbr.rel (%p305) target = $region48
      $region47: #{bert_class_forward.1} parent=5 // pred_region
        // Predicated region
        $region49: #{bert_class_forward.1} parent=47 // pred_check
          %p308 = pneg %p39
        $region50: #{bert_class_forward.1} parent=47 // pred_check_branch
          %310 = sbr.rel (%p308) target = $region52
        $region51: #{bert_class_forward.1} parent=47 // pred_region
          %p311 = scmp.lt.s32.totalorder %s19, 1
          %s312 = scalar_select %p311, %s19, 1
          %s313 = smul.addr %s312, 8
          %s314 = scalar_lea.vmem %s0, %s313
        $region52: #{bert_class_forward.1} parent=47 // pred_fallthru
          _
        // Predicated region
        $region53: #{bert_class_forward.1} parent=47 // pred_check
          %p315 = pneg %p65
        $region54: #{bert_class_forward.1} parent=47 // pred_check_branch
          %317 = sbr.rel (%p315) target = $region56
        $region55: #{bert_class_forward.1} parent=47 // pred_region
          %p318 = scmp.lt.s32.totalorder %s19, 1
          %s319 = scalar_select %p318, %s19, 1
          %s320 = scalar_lea.vmem %s1, %s319
        $region56: #{bert_class_forward.1} parent=47 // pred_fallthru
          _
      $region48: #{bert_class_forward.1} parent=5 // pred_fallthru
        _
      %p321 = scmp.le.s32.totalorder 1, %s19
      %p322 = scmp.lt.s32.totalorder %s19, 3
      %p323 = pnand %p321, %p322
      %p324 = pneg %p323
      // Predicated region
      $region57: #{bert_class_forward.1} parent=5 // pred_check
        _
      $region58: #{bert_class_forward.1} parent=5 // pred_check_branch
        %326 = sbr.rel (%p323) target = $region60
      $region59: #{bert_class_forward.1} parent=5 // pred_region
        %s327 = ssub.s32 %s19, 1
        %p328 = scmp.lt.s32.totalorder %s24, 1
        %s329 = scalar_select %p328, %s24, 1
        %s330 = smul.addr %s329, 8
        %s331 = scalar_lea.vmem %s0, %s330
        %p332 = pneg %p45
        %p333 = pneg %p42
        %p334 = scmp.lt.s32.totalorder %s24, 1
        %s335 = scalar_select %p334, %s24, 1
        %s336 = scalar_lea.vmem %s1, %s335
        %p337 = pneg %p71
        %p338 = pneg %p68
        %p339 = pneg %p92
        %p340 = pneg %p89
        %p341 = pneg %p113
        %p342 = pneg %p110
        %p343 = pneg %p134
        %p344 = pneg %p131
        %p345 = pneg %p155
        %p346 = pneg %p152
        %p347 = pneg %p176
        %p348 = pneg %p173
        %p349 = pneg %p197
        %p350 = pneg %p194
        %p351 = pneg %p218
        %p352 = pneg %p215
        %p353 = pneg %p239
        %p354 = pneg %p236
        %p355 = pneg %p265
        %p356 = pneg %p262
        %s357 = sand.u32 %s252, 1
        %s358 = scalar_lea.sflag [#allocation4], %s357
        %s359 = sand.u32 %s252, 1
        %s360 = scalar_lea.vmem [#allocation3], %s359
        %p361 = scmp.lt.s32.totalorder %s24, 1
        %s362 = scalar_select %p361, %s24, 1
        %s363 = smul.addr %s362, 8
        %s364 = scalar_lea.vmem %s0, %s363
        %p365 = scmp.lt.s32.totalorder %s24, 1
        %s366 = scalar_select %p365, %s24, 1
        %s367 = scalar_lea.vmem %s1, %s366
        %v369 = vlaneseq
        %v370 = vand.u32 %v369, 127
        %vm371 = vcmp.lt.s32.totalorder %v370, 32
        %v372 = vsel %vm371, 1, 0
        %v373 = vcvt.s32.f32 %v372
        %v374 = vld [vmem:[%s2] sm:$0xf]
        %v375 = vld [vmem:[%s364] sm:$0xff]
        %376 = vadd.xlane.f32.xlu0 %v375
        %v377 = vpop.xlane.xlu0 %376
        %v378 = vmul.f32 %v377, 0.03125
        %v379 = vsub.f32 %v375, %v378
        %v380 = vmul.f32 %v379, %v373
        %v381 = vmul.f32 %v380, %v380
        %382 = vadd.xlane.f32.xlu0 %v381
        %v383 = vpop.xlane.xlu0 %382
        %v384 = vmul.f32 %v383, 0.03125
        %v385 = vadd.f32 %v384, 1e-12
        %v386 = vrsqrt.pop %v385
        %v387 = vmul.f32 %v380, %v386
        %v388 = vlaneseq
        %v389 = vshrl.u32 %v388, 7
        %v390 = vsub.s32 0, %v389
        %v391 = vrot.slane %v374, %v390
        %v392 = vmul.f32 %v387, %v391
        %v393 = vlaneseq
        %v394 = vshrl.u32 %v393, 7
        %v395 = vsub.s32 1, %v394
        %v396 = vrot.slane %v374, %v395
        %v397 = vadd.f32 %v392, %v396
        %v398 = vld [vmem:[%s367] sm:$0x1]
        %v399 = vsub.f32 1.0, %v398
        %v400 = vmul.f32 %v399, -1e+09
        %v402 = vlaneseq
        %v403 = vshrl.u32 %v402, 7
        %v404 = vsub.s32 0, %v403
        %v405 = vrot.slane %v400, %v404
        %407 = vst [vmem:[#allocation2] sm:$0xff] 0.0
        %v408 = vld [vmem:[%s3] sm:$0xff]
        %v409 = vpack.c.bf16 %v397, %v397
        %v410 = vld [vmem:[%s4] sm:$0xf]
        %v411 = vld [vmem:[%s4 + $0x4] sm:$0xf]
        %v412 = vld [vmem:[%s4 + $0x8] sm:$0xf]
        %v413 = vld [vmem:[%s4 + $0xc] sm:$0xf]
        %v414 = vld [vmem:[%s4 + $0x10] sm:$0xf]
        %v415 = vld [vmem:[%s4 + $0x14] sm:$0xf]
        %v416 = vld [vmem:[%s4 + $0x18] sm:$0xf]
        %v417 = vld [vmem:[%s4 + $0x1c] sm:$0xf]
        %v418 = vld [vmem:[%s4 + $0x20] sm:$0xf]
        %v419 = vld [vmem:[%s4 + $0x24] sm:$0xf]
        %v420 = vld [vmem:[%s4 + $0x28] sm:$0xf]
        %v421 = vld [vmem:[%s4 + $0x2c] sm:$0xf]
        %v422 = vld [vmem:[%s4 + $0x30] sm:$0xf]
        %v423 = vld [vmem:[%s4 + $0x34] sm:$0xf]
        %v424 = vld [vmem:[%s4 + $0x38] sm:$0xf]
        %v425 = vld [vmem:[%s4 + $0x3c] sm:$0xf]
        %v426 = vlaneseq
        %v427 = vshrl.u32 %v426, 7
        %v428 = vsub.s32 0, %v427
        %v429 = vrot.slane %v408, %v428
        %v446 = vunpack.c.l.b16 %v410
        %v447 = vunpack.c.l.b16 %v411
        %v448 = vunpack.c.l.b16 %v412
        %v449 = vunpack.c.l.b16 %v413
        %v450 = vunpack.c.l.b16 %v414
        %v451 = vunpack.c.l.b16 %v415
        %v452 = vunpack.c.l.b16 %v416
        %v453 = vunpack.c.l.b16 %v417
        %v454 = vunpack.c.l.b16 %v418
        %v455 = vunpack.c.l.b16 %v419
        %v456 = vunpack.c.l.b16 %v420
        %v457 = vunpack.c.l.b16 %v421
        %v458 = vunpack.c.l.b16 %v422
        %v459 = vunpack.c.l.b16 %v423
        %v460 = vunpack.c.l.b16 %v424
        %v461 = vunpack.c.l.b16 %v425
        %v462 = vpack.c.b16 %v447, %v446
        %v463 = vpack.c.b16 %v449, %v448
        %v464 = vpack.c.b16 %v451, %v450
        %v465 = vpack.c.b16 %v453, %v452
        %v466 = vpack.c.b16 %v455, %v454
        %v467 = vpack.c.b16 %v457, %v456
        %v468 = vpack.c.b16 %v459, %v458
        %v469 = vpack.c.b16 %v461, %v460
        %478 = vmatprep.subr.bf16.mxu0 0
        %479 = vmatpush1.bf16.msra.mxu0 %v462
        %480 = vmatprep.subr.bf16.mxu0 0
        %481 = vmatpush1.bf16.msra.mxu0 %v463
        %482 = vmatprep.subr.bf16.mxu0 0
        %483 = vmatpush1.bf16.msra.mxu0 %v464
        %484 = vmatprep.subr.bf16.mxu0 0
        %485 = vmatpush1.bf16.msra.mxu0 %v465
        %486 = vmatprep.subr.bf16.mxu0 0
        %487 = vmatpush1.bf16.msra.mxu0 %v466
        %488 = vmatprep.subr.bf16.mxu0 0
        %489 = vmatpush1.bf16.msra.mxu0 %v467
        %490 = vmatprep.subr.bf16.mxu0 0
        %491 = vmatpush1.bf16.msra.mxu0 %v468
        %492 = vmatprep.subr.bf16.mxu0 0
        %493 = vmatpush1.bf16.msra.mxu0 %v469
        %494 = vmatprep.subr.bf16.mxu0 0
        %495 = vmatpush1.bf16.msra.mxu0 0
        %496 = vmatprep.subr.bf16.mxu0 0
        %497 = vmatpush1.bf16.msra.mxu0 0
        %498 = vmatprep.subr.bf16.mxu0 0
        %499 = vmatpush1.bf16.msra.mxu0 0
        %500 = vmatprep.subr.bf16.mxu0 0
        %501 = vmatpush1.bf16.msra.mxu0 0
        %502 = vmatprep.subr.bf16.mxu0 0
        %503 = vmatpush1.bf16.msra.mxu0 0
        %504 = vmatprep.subr.bf16.mxu0 0
        %505 = vmatpush1.bf16.msra.mxu0 0
        %506 = vmatprep.subr.bf16.mxu0 0
        %507 = vmatpush1.bf16.msra.mxu0 0
        %508 = vmatprep.subr.bf16.mxu0 0
        %509 = vmatpush1.bf16.msra.mxu0 0
        %510 = vmatprep.mubr.bf16.mxu0 0
        %511 = vmatmul.mubr.bf16.gmra.mrb[0].mxu0 %v409
        %v512 = vpop.f32.mrb[0].mxu0
        %v513 = vadd.f32 %v429, %v512
        %v514 = vpop.f32.mrb[0].mxu0
        %v515 = vpop.f32.mrb[0].mxu0
        %v516 = vpop.f32.mrb[0].mxu0
        %517 = vdwg.mxu0
        %519 = vrot.lane.b32.xlu0 %v513, 112
        %v520 = vpop.permute.xlu0 %519
        %v522 = vpack.c.bf16 %v513, %v513
        %v523 = vpack.c.bf16 %v520, %v520
        %525 = vrot.lane.b32.xlu0 %v522, 96
        %v526 = vpop.permute.xlu0 %525
        %vm527 = vcmask 130048
        %v529 = vsel %vm527, %v522, 0
        %v532 = vsel %vm527, %v526, 0
        %534 = vmatprep.subr.bf16.mxu0 0
        %535 = vmatpush1.bf16.xpose.msra.mxu0 %v532
        %536 = vmatprep.subr.bf16.mxu0 0
        %537 = vmatpush1.bf16.xpose.msra.mxu0 0
        %538 = vmatprep.subr.bf16.mxu0 0
        %539 = vmatpush1.bf16.xpose.msra.mxu0 0
        %540 = vmatprep.subr.bf16.mxu0 0
        %541 = vmatpush1.bf16.xpose.msra.mxu0 0
        %542 = vmatprep.subr.bf16.mxu0 0
        %543 = vmatpush1.bf16.xpose.msra.mxu0 0
        %544 = vmatprep.subr.bf16.mxu0 0
        %545 = vmatpush1.bf16.xpose.msra.mxu0 0
        %546 = vmatprep.subr.bf16.mxu0 0
        %547 = vmatpush1.bf16.xpose.msra.mxu0 0
        %548 = vmatprep.subr.bf16.mxu0 0
        %549 = vmatpush1.bf16.xpose.msra.mxu0 0
        %550 = vmatprep.subr.bf16.mxu0 0
        %551 = vmatpush1.bf16.xpose.msra.mxu0 0
        %552 = vmatprep.subr.bf16.mxu0 0
        %553 = vmatpush1.bf16.xpose.msra.mxu0 0
        %554 = vmatprep.subr.bf16.mxu0 0
        %555 = vmatpush1.bf16.xpose.msra.mxu0 0
        %556 = vmatprep.subr.bf16.mxu0 0
        %557 = vmatpush1.bf16.xpose.msra.mxu0 0
        %558 = vmatprep.subr.bf16.mxu0 0
        %559 = vmatpush1.bf16.xpose.msra.mxu0 0
        %560 = vmatprep.subr.bf16.mxu0 0
        %561 = vmatpush1.bf16.xpose.msra.mxu0 0
        %562 = vmatprep.subr.bf16.mxu0 0
        %563 = vmatpush1.bf16.xpose.msra.mxu0 0
        %564 = vmatprep.subr.bf16.mxu0 0
        %565 = vmatpush1.bf16.xpose.msra.mxu0 0
        %566 = vmatprep.mubr.bf16.mxu0 0
        %567 = vmatmul.mubr.bf16.gmra.mrb[0].mxu0 %v529
        %v568 = vpop.f32.mrb[0].mxu0
        %v569 = vadd.f32 0.0, %v568
        %v570 = vpop.f32.mrb[0].mxu0
        %v571 = vpop.f32.mrb[0].mxu0
        %v572 = vpop.f32.mrb[0].mxu0
        %573 = vdwg.mxu0
        %575 = vrot.lane.b32.xlu0 %v523, 96
        %v576 = vpop.permute.xlu0 %575
        %v578 = vsel %vm527, %v523, 0
        %v581 = vsel %vm527, %v576, 0
        %583 = vmatprep.subr.bf16.mxu0 0
        %584 = vmatpush1.bf16.xpose.msra.mxu0 %v581
        %585 = vmatprep.subr.bf16.mxu0 0
        %586 = vmatpush1.bf16.xpose.msra.mxu0 0
        %587 = vmatprep.subr.bf16.mxu0 0
        %588 = vmatpush1.bf16.xpose.msra.mxu0 0
        %589 = vmatprep.subr.bf16.mxu0 0
        %590 = vmatpush1.bf16.xpose.msra.mxu0 0
        %591 = vmatprep.subr.bf16.mxu0 0
        %592 = vmatpush1.bf16.xpose.msra.mxu0 0
        %593 = vmatprep.subr.bf16.mxu0 0
        %594 = vmatpush1.bf16.xpose.msra.mxu0 0
        %595 = vmatprep.subr.bf16.mxu0 0
        %596 = vmatpush1.bf16.xpose.msra.mxu0 0
        %597 = vmatprep.subr.bf16.mxu0 0
        %598 = vmatpush1.bf16.xpose.msra.mxu0 0
        %599 = vmatprep.subr.bf16.mxu0 0
        %600 = vmatpush1.bf16.xpose.msra.mxu0 0
        %601 = vmatprep.subr.bf16.mxu0 0
        %602 = vmatpush1.bf16.xpose.msra.mxu0 0
        %603 = vmatprep.subr.bf16.mxu0 0
        %604 = vmatpush1.bf16.xpose.msra.mxu0 0
        %605 = vmatprep.subr.bf16.mxu0 0
        %606 = vmatpush1.bf16.xpose.msra.mxu0 0
        %607 = vmatprep.subr.bf16.mxu0 0
        %608 = vmatpush1.bf16.xpose.msra.mxu0 0
        %609 = vmatprep.subr.bf16.mxu0 0
        %610 = vmatpush1.bf16.xpose.msra.mxu0 0
        %611 = vmatprep.subr.bf16.mxu0 0
        %612 = vmatpush1.bf16.xpose.msra.mxu0 0
        %613 = vmatprep.subr.bf16.mxu0 0
        %614 = vmatpush1.bf16.xpose.msra.mxu0 0
        %615 = vmatprep.mubr.bf16.mxu0 0
        %616 = vmatmul.mubr.bf16.gmra.mrb[0].mxu0 %v578
        %v617 = vpop.f32.mrb[0].mxu0
        %v618 = vadd.f32 0.0, %v617
        %v619 = vpop.f32.mrb[0].mxu0
        %v620 = vpop.f32.mrb[0].mxu0
        %v621 = vpop.f32.mrb[0].mxu0
        %622 = vdwg.mxu0
        %v623 = vmul.f32 %v569, 0.25
        %v624 = vmul.f32 %v618, 0.25
        %v625 = vadd.f32 %v623, %v405
        %v626 = vadd.f32 %v624, %v405
        %vm627 = vcmask 64512
        %v628 = vsel %vm627, %v625, -inf
        %629 = vmax.xlane.f32.xlu0 %v628
        %v630 = vpop.xlane.xlu0 %629
        %v631 = vsel %vm627, %v626, -inf
        %632 = vmax.xlane.f32.xlu0 %v631
        %v633 = vpop.xlane.xlu0 %632
        %v634 = vsub.f32 %v625, %v630
        %v635 = vsub.f32 %v626, %v633
        %v636 = vmul.f32 %v634, 1.442695
        %v637 = vpow.pop %v636
        %v638 = vmul.f32 %v635, 1.442695
        %v639 = vpow.pop %v638
        %v640 = vsel %vm627, %v637, 0.0
        %641 = vadd.xlane.f32.xlu0 %v640
        %v642 = vpop.xlane.xlu0 %641
        %v643 = vsel %vm627, %v639, 0.0
        %644 = vadd.xlane.f32.xlu0 %v643
        %v645 = vpop.xlane.xlu0 %644
        %v646 = vrcp.pop %v642
        %v647 = vrcp.pop %v645
        %v648 = vmul.f32 %v637, %v646
        %v649 = vmul.f32 %v639, %v647
        %v650 = vpack.c.bf16 %v648, %v648
        %v651 = vpack.c.bf16 %v649, %v649
        %652 = vrot.lane.b32.xlu0 %v522, 64
        %v653 = vpop.permute.xlu0 %652
        %v655 = vsel %vm627, %v650, 0
        %vm657 = vcmask 1043456
        %v659 = vsel %vm657, %v653, 0
        %661 = vmatprep.subr.bf16.mxu0 0
        %662 = vmatpush1.bf16.msra.mxu0 %v659
        %663 = vmatprep.subr.bf16.mxu0 0
        %664 = vmatpush1.bf16.msra.mxu0 0
        %665 = vmatprep.subr.bf16.mxu0 0
        %666 = vmatpush1.bf16.msra.mxu0 0
        %667 = vmatprep.subr.bf16.mxu0 0
        %668 = vmatpush1.bf16.msra.mxu0 0
        %669 = vmatprep.subr.bf16.mxu0 0
        %670 = vmatpush1.bf16.msra.mxu0 0
        %671 = vmatprep.subr.bf16.mxu0 0
        %672 = vmatpush1.bf16.msra.mxu0 0
        %673 = vmatprep.subr.bf16.mxu0 0
        %674 = vmatpush1.bf16.msra.mxu0 0
        %675 = vmatprep.subr.bf16.mxu0 0
        %676 = vmatpush1.bf16.msra.mxu0 0
        %677 = vmatprep.subr.bf16.mxu0 0
        %678 = vmatpush1.bf16.msra.mxu0 0
        %679 = vmatprep.subr.bf16.mxu0 0
        %680 = vmatpush1.bf16.msra.mxu0 0
        %681 = vmatprep.subr.bf16.mxu0 0
        %682 = vmatpush1.bf16.msra.mxu0 0
        %683 = vmatprep.subr.bf16.mxu0 0
        %684 = vmatpush1.bf16.msra.mxu0 0
        %685 = vmatprep.subr.bf16.mxu0 0
        %686 = vmatpush1.bf16.msra.mxu0 0
        %687 = vmatprep.subr.bf16.mxu0 0
        %688 = vmatpush1.bf16.msra.mxu0 0
        %689 = vmatprep.subr.bf16.mxu0 0
        %690 = vmatpush1.bf16.msra.mxu0 0
        %691 = vmatprep.subr.bf16.mxu0 0
        %692 = vmatpush1.bf16.msra.mxu0 0
        %693 = vmatprep.mubr.bf16.mxu0 0
        %694 = vmatmul.mubr.bf16.gmra.mrb[0].mxu0 %v655
        %v695 = vpop.f32.mrb[0].mxu0
        %v696 = vadd.f32 0.0, %v695
        %v697 = vpop.f32.mrb[0].mxu0
        %v698 = vpop.f32.mrb[0].mxu0
        %v699 = vpop.f32.mrb[0].mxu0
        %700 = vdwg.mxu0
        %701 = vrot.lane.b32.xlu0 %v523, 64
        %v702 = vpop.permute.xlu0 %701
        %v704 = vsel %vm627, %v651, 0
        %v707 = vsel %vm657, %v702, 0
        %709 = vmatprep.subr.bf16.mxu0 0
        %710 = vmatpush1.bf16.msra.mxu0 %v707
        %711 = vmatprep.subr.bf16.mxu0 0
        %712 = vmatpush1.bf16.msra.mxu0 0
        %713 = vmatprep.subr.bf16.mxu0 0
        %714 = vmatpush1.bf16.msra.mxu0 0
        %715 = vmatprep.subr.bf16.mxu0 0
        %716 = vmatpush1.bf16.msra.mxu0 0
        %717 = vmatprep.subr.bf16.mxu0 0
        %718 = vmatpush1.bf16.msra.mxu0 0
        %719 = vmatprep.subr.bf16.mxu0 0
        %720 = vmatpush1.bf16.msra.mxu0 0
        %721 = vmatprep.subr.bf16.mxu0 0
        %722 = vmatpush1.bf16.msra.mxu0 0
        %723 = vmatprep.subr.bf16.mxu0 0
        %724 = vmatpush1.bf16.msra.mxu0 0
        %725 = vmatprep.subr.bf16.mxu0 0
        %726 = vmatpush1.bf16.msra.mxu0 0
        %727 = vmatprep.subr.bf16.mxu0 0
        %728 = vmatpush1.bf16.msra.mxu0 0
        %729 = vmatprep.subr.bf16.mxu0 0
        %730 = vmatpush1.bf16.msra.mxu0 0
        %731 = vmatprep.subr.bf16.mxu0 0
        %732 = vmatpush1.bf16.msra.mxu0 0
        %733 = vmatprep.subr.bf16.mxu0 0
        %734 = vmatpush1.bf16.msra.mxu0 0
        %735 = vmatprep.subr.bf16.mxu0 0
        %736 = vmatpush1.bf16.msra.mxu0 0
        %737 = vmatprep.subr.bf16.mxu0 0
        %738 = vmatpush1.bf16.msra.mxu0 0
        %739 = vmatprep.subr.bf16.mxu0 0
        %740 = vmatpush1.bf16.msra.mxu0 0
        %741 = vmatprep.mubr.bf16.mxu0 0
        %742 = vmatmul.mubr.bf16.gmra.mrb[0].mxu0 %v704
        %v743 = vpop.f32.mrb[0].mxu0
        %v744 = vadd.f32 0.0, %v743
        %v745 = vpop.f32.mrb[0].mxu0
        %v746 = vpop.f32.mrb[0].mxu0
        %v747 = vpop.f32.mrb[0].mxu0
        %748 = vdwg.mxu0
        %749 = vst.msk [vmem:[#allocation2] sm:$0xff] %vm527, %v696
        %751 = vrot.lane.b32.xlu0 %v744, 16
        %v752 = vpop.permute.xlu0 %751
        %vm754 = vcmask 261248
        %755 = vst.msk [vmem:[#allocation2] sm:$0xff] %vm754, %v752
        %v756 = vld [vmem:[#allocation2] sm:$0xff]
        %v757 = vpack.c.bf16 %v756, %v756
        %v758 = vld [vmem:[%s5] sm:$0xf]
        %v759 = vld [vmem:[%s5 + $0x4] sm:$0xf]
        %v760 = vld [vmem:[%s5 + $0x8] sm:$0xf]
        %v761 = vld [vmem:[%s5 + $0xc] sm:$0xf]
        %v762 = vld [vmem:[%s5 + $0x10] sm:$0xf]
        %v763 = vld [vmem:[%s5 + $0x14] sm:$0xf]
        %v764 = vld [vmem:[%s5 + $0x18] sm:$0xf]
        %v765 = vld [vmem:[%s5 + $0x1c] sm:$0xf]
        %v766 = vld [vmem:[%s5 + $0x20] sm:$0xf]
        %v767 = vld [vmem:[%s5 + $0x24] sm:$0xf]
        %v768 = vld [vmem:[%s5 + $0x28] sm:$0xf]
        %v769 = vld [vmem:[%s5 + $0x2c] sm:$0xf]
        %v770 = vld [vmem:[%s5 + $0x30] sm:$0xf]
        %v771 = vld [vmem:[%s5 + $0x34] sm:$0xf]
        %v772 = vld [vmem:[%s5 + $0x38] sm:$0xf]
        %v773 = vld [vmem:[%s5 + $0x3c] sm:$0xf]
        %v774 = vlaneseq
        %v775 = vshrl.u32 %v774, 7
        %v776 = vsub.s32 1, %v775
        %v777 = vrot.slane %v408, %v776
        %v794 = vunpack.c.l.b16 %v758
        %v795 = vunpack.c.l.b16 %v759
        %v796 = vunpack.c.l.b16 %v760
        %v797 = vunpack.c.l.b16 %v761
        %v798 = vunpack.c.l.b16 %v762
        %v799 = vunpack.c.l.b16 %v763
        %v800 = vunpack.c.l.b16 %v764
        %v801 = vunpack.c.l.b16 %v765
        %v802 = vunpack.c.l.b16 %v766
        %v803 = vunpack.c.l.b16 %v767
        %v804 = vunpack.c.l.b16 %v768
        %v805 = vunpack.c.l.b16 %v769
        %v806 = vunpack.c.l.b16 %v770
        %v807 = vunpack.c.l.b16 %v771
        %v808 = vunpack.c.l.b16 %v772
        %v809 = vunpack.c.l.b16 %v773
        %v810 = vpack.c.b16 %v795, %v794
        %v811 = vpack.c.b16 %v797, %v796
        %v812 = vpack.c.b16 %v799, %v798
        %v813 = vpack.c.b16 %v801, %v800
        %v814 = vpack.c.b16 %v803, %v802
        %v815 = vpack.c.b16 %v805, %v804
        %v816 = vpack.c.b16 %v807, %v806
        %v817 = vpack.c.b16 %v809, %v808
        %826 = vmatprep.subr.bf16.mxu0 0
        %827 = vmatpush1.bf16.msra.mxu0 %v810
        %828 = vmatprep.subr.bf16.mxu0 0
        %829 = vmatpush1.bf16.msra.mxu0 %v811
        %830 = vmatprep.subr.bf16.mxu0 0
        %831 = vmatpush1.bf16.msra.mxu0 %v812
        %832 = vmatprep.subr.bf16.mxu0 0
        %833 = vmatpush1.bf16.msra.mxu0 %v813
        %834 = vmatprep.subr.bf16.mxu0 0
        %835 = vmatpush1.bf16.msra.mxu0 %v814
        %836 = vmatprep.subr.bf16.mxu0 0
        %837 = vmatpush1.bf16.msra.mxu0 %v815
        %838 = vmatprep.subr.bf16.mxu0 0
        %839 = vmatpush1.bf16.msra.mxu0 %v816
        %840 = vmatprep.subr.bf16.mxu0 0
        %841 = vmatpush1.bf16.msra.mxu0 %v817
        %842 = vmatprep.subr.bf16.mxu0 0
        %843 = vmatpush1.bf16.msra.mxu0 0
        %844 = vmatprep.subr.bf16.mxu0 0
        %845 = vmatpush1.bf16.msra.mxu0 0
        %846 = vmatprep.subr.bf16.mxu0 0
        %847 = vmatpush1.bf16.msra.mxu0 0
        %848 = vmatprep.subr.bf16.mxu0 0
        %849 = vmatpush1.bf16.msra.mxu0 0
        %850 = vmatprep.subr.bf16.mxu0 0
        %851 = vmatpush1.bf16.msra.mxu0 0
        %852 = vmatprep.subr.bf16.mxu0 0
        %853 = vmatpush1.bf16.msra.mxu0 0
        %854 = vmatprep.subr.bf16.mxu0 0
        %855 = vmatpush1.bf16.msra.mxu0 0
        %856 = vmatprep.subr.bf16.mxu0 0
        %857 = vmatpush1.bf16.msra.mxu0 0
        %858 = vmatprep.mubr.bf16.mxu0 0
        %859 = vmatmul.mubr.bf16.gmra.mrb[0].mxu0 %v757
        %v860 = vpop.f32.mrb[0].mxu0
        %v861 = vadd.f32 %v777, %v860
        %v862 = vpop.f32.mrb[0].mxu0
        %v863 = vpop.f32.mrb[0].mxu0
        %v864 = vpop.f32.mrb[0].mxu0
        %865 = vdwg.mxu0
        %v866 = vadd.f32 %v861, %v397
        %867 = vadd.xlane.f32.xlu0 %v866
        %v868 = vpop.xlane.xlu0 %867
        %v869 = vmul.f32 %v868, 0.03125
        %v870 = vsub.f32 %v866, %v869
        %v871 = vmul.f32 %v870, %v373
        %v872 = vmul.f32 %v871, %v871
        %873 = vadd.xlane.f32.xlu0 %v872
        %v874 = vpop.xlane.xlu0 %873
        %v875 = vmul.f32 %v874, 0.03125
        %v876 = vadd.f32 %v875, 1e-12
        %v877 = vrsqrt.pop %v876
        %v878 = vmul.f32 %v871, %v877
        %v879 = vlaneseq
        %v880 = vshrl.u32 %v879, 7
        %v881 = vsub.s32 2, %v880
        %v882 = vrot.slane %v408, %v881
        %v883 = vmul.f32 %v878, %v882
        %v884 = vlaneseq
        %v885 = vshrl.u32 %v884, 7
        %v886 = vsub.s32 3, %v885
        %v887 = vrot.slane %v408, %v886
        %v888 = vadd.f32 %v883, %v887
        %v889 = vpack.c.bf16 %v888, %v888
        %v890 = vld [vmem:[%s6] sm:$0xf]
        %v891 = vld [vmem:[%s6 + $0x4] sm:$0xf]
        %v892 = vld [vmem:[%s6 + $0x8] sm:$0xf]
        %v893 = vld [vmem:[%s6 + $0xc] sm:$0xf]
        %v894 = vld [vmem:[%s6 + $0x10] sm:$0xf]
        %v895 = vld [vmem:[%s6 + $0x14] sm:$0xf]
        %v896 = vld [vmem:[%s6 + $0x18] sm:$0xf]
        %v897 = vld [vmem:[%s6 + $0x1c] sm:$0xf]
        %v898 = vld [vmem:[%s6 + $0x20] sm:$0xf]
        %v899 = vld [vmem:[%s6 + $0x24] sm:$0xf]
        %v900 = vld [vmem:[%s6 + $0x28] sm:$0xf]
        %v901 = vld [vmem:[%s6 + $0x2c] sm:$0xf]
        %v902 = vld [vmem:[%s6 + $0x30] sm:$0xf]
        %v903 = vld [vmem:[%s6 + $0x34] sm:$0xf]
        %v904 = vld [vmem:[%s6 + $0x38] sm:$0xf]
        %v905 = vld [vmem:[%s6 + $0x3c] sm:$0xf]
        %v906 = vlaneseq
        %v907 = vshrl.u32 %v906, 7
        %v908 = vsub.s32 4, %v907
        %v909 = vrot.slane %v408, %v908
        %v926 = vunpack.c.l.b16 %v890
        %v927 = vunpack.c.l.b16 %v891
        %v928 = vunpack.c.l.b16 %v892
        %v929 = vunpack.c.l.b16 %v893
        %v930 = vunpack.c.l.b16 %v894
        %v931 = vunpack.c.l.b16 %v895
        %v932 = vunpack.c.l.b16 %v896
        %v933 = vunpack.c.l.b16 %v897
        %v934 = vunpack.c.l.b16 %v898
        %v935 = vunpack.c.l.b16 %v899
        %v936 = vunpack.c.l.b16 %v900
        %v937 = vunpack.c.l.b16 %v901
        %v938 = vunpack.c.l.b16 %v902
        %v939 = vunpack.c.l.b16 %v903
        %v940 = vunpack.c.l.b16 %v904
        %v941 = vunpack.c.l.b16 %v905
        %v942 = vpack.c.b16 %v927, %v926
        %v943 = vpack.c.b16 %v929, %v928
        %v944 = vpack.c.b16 %v931, %v930
        %v945 = vpack.c.b16 %v933, %v932
        %v946 = vpack.c.b16 %v935, %v934
        %v947 = vpack.c.b16 %v937, %v936
        %v948 = vpack.c.b16 %v939, %v938
        %v949 = vpack.c.b16 %v941, %v940
        %958 = vmatprep.subr.bf16.mxu0 0
        %959 = vmatpush1.bf16.msra.mxu0 %v942
        %960 = vmatprep.subr.bf16.mxu0 0
        %961 = vmatpush1.bf16.msra.mxu0 %v943
        %962 = vmatprep.subr.bf16.mxu0 0
        %963 = vmatpush1.bf16.msra.mxu0 %v944
        %964 = vmatprep.subr.bf16.mxu0 0
        %965 = vmatpush1.bf16.msra.mxu0 %v945
        %966 = vmatprep.subr.bf16.mxu0 0
        %967 = vmatpush1.bf16.msra.mxu0 %v946
        %968 = vmatprep.subr.bf16.mxu0 0
        %969 = vmatpush1.bf16.msra.mxu0 %v947
        %970 = vmatprep.subr.bf16.mxu0 0
        %971 = vmatpush1.bf16.msra.mxu0 %v948
        %972 = vmatprep.subr.bf16.mxu0 0
        %973 = vmatpush1.bf16.msra.mxu0 %v949
        %974 = vmatprep.subr.bf16.mxu0 0
        %975 = vmatpush1.bf16.msra.mxu0 0
        %976 = vmatprep.subr.bf16.mxu0 0
        %977 = vmatpush1.bf16.msra.mxu0 0
        %978 = vmatprep.subr.bf16.mxu0 0
        %979 = vmatpush1.bf16.msra.mxu0 0
        %980 = vmatprep.subr.bf16.mxu0 0
        %981 = vmatpush1.bf16.msra.mxu0 0
        %982 = vmatprep.subr.bf16.mxu0 0
        %983 = vmatpush1.bf16.msra.mxu0 0
        %984 = vmatprep.subr.bf16.mxu0 0
        %985 = vmatpush1.bf16.msra.mxu0 0
        %986 = vmatprep.subr.bf16.mxu0 0
        %987 = vmatpush1.bf16.msra.mxu0 0
        %988 = vmatprep.subr.bf16.mxu0 0
        %989 = vmatpush1.bf16.msra.mxu0 0
        %990 = vmatprep.mubr.bf16.mxu0 0
        %991 = vmatmul.mubr.bf16.gmra.mrb[0].mxu0 %v889
        %v992 = vpop.f32.mrb[0].mxu0
        %v993 = vadd.f32 %v909, %v992
        %v994 = vpop.f32.mrb[0].mxu0
        %v995 = vpop.f32.mrb[0].mxu0
        %v996 = vpop.f32.mrb[0].mxu0
        %997 = vdwg.mxu0
        %v998 = vmul.f32 %v993, %v993
        %v999 = vmul.f32 %v993, %v998
        %v1000 = vmul.f32 %v999, 0.044715
        %v1001 = vadd.f32 %v993, %v1000
        %v1002 = vmul.f32 %v1001, 0.7978846
        %v1003 = vtanh.pop %v1002
        %v1004 = vadd.f32 %v1003, 1.0
        %v1005 = vmul.f32 %v1004, 0.5
        %v1006 = vmul.f32 %v993, %v1005
        %v1007 = vpack.c.bf16 %v1006, %v1006
        %v1008 = vld [vmem:[%s7] sm:$0xf]
        %v1009 = vld [vmem:[%s7 + $0x4] sm:$0xf]
        %v1010 = vld [vmem:[%s7 + $0x8] sm:$0xf]
        %v1011 = vld [vmem:[%s7 + $0xc] sm:$0xf]
        %v1012 = vld [vmem:[%s7 + $0x10] sm:$0xf]
        %v1013 = vld [vmem:[%s7 + $0x14] sm:$0xf]
        %v1014 = vld [vmem:[%s7 + $0x18] sm:$0xf]
        %v1015 = vld [vmem:[%s7 + $0x1c] sm:$0xf]
        %v1016 = vld [vmem:[%s7 + $0x20] sm:$0xf]
        %v1017 = vld [vmem:[%s7 + $0x24] sm:$0xf]
        %v1018 = vld [vmem:[%s7 + $0x28] sm:$0xf]
        %v1019 = vld [vmem:[%s7 + $0x2c] sm:$0xf]
        %v1020 = vld [vmem:[%s7 + $0x30] sm:$0xf]
        %v1021 = vld [vmem:[%s7 + $0x34] sm:$0xf]
        %v1022 = vld [vmem:[%s7 + $0x38] sm:$0xf]
        %v1023 = vld [vmem:[%s7 + $0x3c] sm:$0xf]
        %v1024 = vlaneseq
        %v1025 = vshrl.u32 %v1024, 7
        %v1026 = vsub.s32 5, %v1025
        %v1027 = vrot.slane %v408, %v1026
        %v1044 = vunpack.c.l.b16 %v1008
        %v1045 = vunpack.c.l.b16 %v1009
        %v1046 = vunpack.c.l.b16 %v1010
        %v1047 = vunpack.c.l.b16 %v1011
        %v1048 = vunpack.c.l.b16 %v1012
        %v1049 = vunpack.c.l.b16 %v1013
        %v1050 = vunpack.c.l.b16 %v1014
        %v1051 = vunpack.c.l.b16 %v1015
        %v1052 = vunpack.c.l.b16 %v1016
        %v1053 = vunpack.c.l.b16 %v1017
        %v1054 = vunpack.c.l.b16 %v1018
        %v1055 = vunpack.c.l.b16 %v1019
        %v1056 = vunpack.c.l.b16 %v1020
        %v1057 = vunpack.c.l.b16 %v1021
        %v1058 = vunpack.c.l.b16 %v1022
        %v1059 = vunpack.c.l.b16 %v1023
        %v1060 = vpack.c.b16 %v1045, %v1044
        %v1061 = vpack.c.b16 %v1047, %v1046
        %v1062 = vpack.c.b16 %v1049, %v1048
        %v1063 = vpack.c.b16 %v1051, %v1050
        %v1064 = vpack.c.b16 %v1053, %v1052
        %v1065 = vpack.c.b16 %v1055, %v1054
        %v1066 = vpack.c.b16 %v1057, %v1056
        %v1067 = vpack.c.b16 %v1059, %v1058
        %1076 = vmatprep.subr.bf16.mxu0 0
        %1077 = vmatpush1.bf16.msra.mxu0 %v1060
        %1078 = vmatprep.subr.bf16.mxu0 0
        %1079 = vmatpush1.bf16.msra.mxu0 %v1061
        %1080 = vmatprep.subr.bf16.mxu0 0
        %1081 = vmatpush1.bf16.msra.mxu0 %v1062
        %1082 = vmatprep.subr.bf16.mxu0 0
        %1083 = vmatpush1.bf16.msra.mxu0 %v1063
        %1084 = vmatprep.subr.bf16.mxu0 0
        %1085 = vmatpush1.bf16.msra.mxu0 %v1064
        %1086 = vmatprep.subr.bf16.mxu0 0
        %1087 = vmatpush1.bf16.msra.mxu0 %v1065
        %1088 = vmatprep.subr.bf16.mxu0 0
        %1089 = vmatpush1.bf16.msra.mxu0 %v1066
        %1090 = vmatprep.subr.bf16.mxu0 0
        %1091 = vmatpush1.bf16.msra.mxu0 %v1067
        %1092 = vmatprep.subr.bf16.mxu0 0
        %1093 = vmatpush1.bf16.msra.mxu0 0
        %1094 = vmatprep.subr.bf16.mxu0 0
        %1095 = vmatpush1.bf16.msra.mxu0 0
        %1096 = vmatprep.subr.bf16.mxu0 0
        %1097 = vmatpush1.bf16.msra.mxu0 0
        %1098 = vmatprep.subr.bf16.mxu0 0
        %1099 = vmatpush1.bf16.msra.mxu0 0
        %1100 = vmatprep.subr.bf16.mxu0 0
        %1101 = vmatpush1.bf16.msra.mxu0 0
        %1102 = vmatprep.subr.bf16.mxu0 0
        %1103 = vmatpush1.bf16.msra.mxu0 0
        %1104 = vmatprep.subr.bf16.mxu0 0
        %1105 = vmatpush1.bf16.msra.mxu0 0
        %1106 = vmatprep.subr.bf16.mxu0 0
        %1107 = vmatpush1.bf16.msra.mxu0 0
        %1108 = vmatprep.mubr.bf16.mxu0 0
        %1109 = vmatmul.mubr.bf16.gmra.mrb[0].mxu0 %v1007
        %v1110 = vpop.f32.mrb[0].mxu0
        %v1111 = vadd.f32 %v1027, %v1110
        %v1112 = vpop.f32.mrb[0].mxu0
        %v1113 = vpop.f32.mrb[0].mxu0
        %v1114 = vpop.f32.mrb[0].mxu0
        %1115 = vdwg.mxu0
        %v1116 = vadd.f32 %v1111, %v888
        %1117 = vadd.xlane.f32.xlu0 %v1116
        %v1118 = vpop.xlane.xlu0 %1117
        %v1119 = vmul.f32 %v1118, 0.03125
        %v1120 = vsub.f32 %v1116, %v1119
        %v1121 = vmul.f32 %v1120, %v373
        %v1122 = vmul.f32 %v1121, %v1121
        %1123 = vadd.xlane.f32.xlu0 %v1122
        %v1124 = vpop.xlane.xlu0 %1123
        %v1125 = vmul.f32 %v1124, 0.03125
        %v1126 = vadd.f32 %v1125, 1e-12
        %v1127 = vrsqrt.pop %v1126
        %v1128 = vmul.f32 %v1121, %v1127
        %v1129 = vlaneseq
        %v1130 = vshrl.u32 %v1129, 7
        %v1131 = vsub.s32 6, %v1130
        %v1132 = vrot.slane %v408, %v1131
        %v1133 = vmul.f32 %v1128, %v1132
        %v1134 = vlaneseq
        %v1135 = vshrl.u32 %v1134, 7
        %v1136 = vsub.s32 7, %v1135
        %v1137 = vrot.slane %v408, %v1136
        %v1138 = vadd.f32 %v1133, %v1137
        %s1139 = scalar_lea.vmem %s3, 8
        %v1140 = vld [vmem:[%s1139] sm:$0xff]
        %v1141 = vpack.c.bf16 %v1138, %v1138
        %s1142 = scalar_lea.vmem %s4, 64
        %v1143 = vld [vmem:[%s1142] sm:$0xf]
        %v1144 = vld [vmem:[%s1142 + $0x4] sm:$0xf]
        %v1145 = vld [vmem:[%s1142 + $0x8] sm:$0xf]
        %v1146 = vld [vmem:[%s1142 + $0xc] sm:$0xf]
        %v1147 = vld [vmem:[%s1142 + $0x10] sm:$0xf]
        %v1148 = vld [vmem:[%s1142 + $0x14] sm:$0xf]
        %v1149 = vld [vmem:[%s1142 + $0x18] sm:$0xf]
        %v1150 = vld [vmem:[%s1142 + $0x1c] sm:$0xf]
        %v1151 = vld [vmem:[%s1142 + $0x20] sm:$0xf]
        %v1152 = vld [vmem:[%s1142 + $0x24] sm:$0xf]
        %v1153 = vld [vmem:[%s1142 + $0x28] sm:$0xf]
        %v1154 = vld [vmem:[%s1142 + $0x2c] sm:$0xf]
        %v1155 = vld [vmem:[%s1142 + $0x30] sm:$0xf]
        %v1156 = vld [vmem:[%s1142 + $0x34] sm:$0xf]
        %v1157 = vld [vmem:[%s1142 + $0x38] sm:$0xf]
        %v1158 = vld [vmem:[%s1142 + $0x3c] sm:$0xf]
        %v1159 = vlaneseq
        %v1160 = vshrl.u32 %v1159, 7
        %v1161 = vsub.s32 0, %v1160
        %v1162 = vrot.slane %v1140, %v1161
        %v1179 = vunpack.c.l.b16 %v1143
        %v1180 = vunpack.c.l.b16 %v1144
        %v1181 = vunpack.c.l.b16 %v1145
        %v1182 = vunpack.c.l.b16 %v1146
        %v1183 = vunpack.c.l.b16 %v1147
        %v1184 = vunpack.c.l.b16 %v1148
        %v1185 = vunpack.c.l.b16 %v1149
        %v1186 = vunpack.c.l.b16 %v1150
        %v1187 = vunpack.c.l.b16 %v1151
        %v1188 = vunpack.c.l.b16 %v1152
        %v1189 = vunpack.c.l.b16 %v1153
        %v1190 = vunpack.c.l.b16 %v1154
        %v1191 = vunpack.c.l.b16 %v1155
        %v1192 = vunpack.c.l.b16 %v1156
        %v1193 = vunpack.c.l.b16 %v1157
        %v1194 = vunpack.c.l.b16 %v1158
        %v1195 = vpack.c.b16 %v1180, %v1179
        %v1196 = vpack.c.b16 %v1182, %v1181
        %v1197 = vpack.c.b16 %v1184, %v1183
        %v1198 = vpack.c.b16 %v1186, %v1185
        %v1199 = vpack.c.b16 %v1188, %v1187
        %v1200 = vpack.c.b16 %v1190, %v1189
        %v1201 = vpack.c.b16 %v1192, %v1191
        %v1202 = vpack.c.b16 %v1194, %v1193
        %1211 = vmatprep.subr.bf16.mxu0 0
        %1212 = vmatpush1.bf16.msra.mxu0 %v1195
        %1213 = vmatprep.subr.bf16.mxu0 0
        %1214 = vmatpush1.bf16.msra.mxu0 %v1196
        %1215 = vmatprep.subr.bf16.mxu0 0
        %1216 = vmatpush1.bf16.msra.mxu0 %v1197
        %1217 = vmatprep.subr.bf16.mxu0 0
        %1218 = vmatpush1.bf16.msra.mxu0 %v1198
        %1219 = vmatprep.subr.bf16.mxu0 0
        %1220 = vmatpush1.bf16.msra.mxu0 %v1199
        %1221 = vmatprep.subr.bf16.mxu0 0
        %1222 = vmatpush1.bf16.msra.mxu0 %v1200
        %1223 = vmatprep.subr.bf16.mxu0 0
        %1224 = vmatpush1.bf16.msra.mxu0 %v1201
        %1225 = vmatprep.subr.bf16.mxu0 0
        %1226 = vmatpush1.bf16.msra.mxu0 %v1202
        %1227 = vmatprep.subr.bf16.mxu0 0
        %1228 = vmatpush1.bf16.msra.mxu0 0
        %1229 = vmatprep.subr.bf16.mxu0 0
        %1230 = vmatpush1.bf16.msra.mxu0 0
        %1231 = vmatprep.subr.bf16.mxu0 0
        %1232 = vmatpush1.bf16.msra.mxu0 0
        %1233 = vmatprep.subr.bf16.mxu0 0
        %1234 = vmatpush1.bf16.msra.mxu0 0
        %1235 = vmatprep.subr.bf16.mxu0 0
        %1236 = vmatpush1.bf16.msra.mxu0 0
        %1237 = vmatprep.subr.bf16.mxu0 0
        %1238 = vmatpush1.bf16.msra.mxu0 0
        %1239 = vmatprep.subr.bf16.mxu0 0
        %1240 = vmatpush1.bf16.msra.mxu0 0
        %1241 = vmatprep.subr.bf16.mxu0 0
        %1242 = vmatpush1.bf16.msra.mxu0 0
        %1243 = vmatprep.mubr.bf16.mxu0 0
        %1244 = vmatmul.mubr.bf16.gmra.mrb[0].mxu0 %v1141
        %v1245 = vpop.f32.mrb[0].mxu0
        %v1246 = vadd.f32 %v1162, %v1245
        %v1247 = vpop.f32.mrb[0].mxu0
        %v1248 = vpop.f32.mrb[0].mxu0
        %v1249 = vpop.f32.mrb[0].mxu0
        %1250 = vdwg.mxu0
        %1252 = vrot.lane.b32.xlu0 %v1246, 112
        %v1253 = vpop.permute.xlu0 %1252
        %v1255 = vpack.c.bf16 %v1246, %v1246
        %v1256 = vpack.c.bf16 %v1253, %v1253
        %1258 = vrot.lane.b32.xlu0 %v1255, 96
        %v1259 = vpop.permute.xlu0 %1258
        %v1261 = vsel %vm527, %v1255, 0
        %v1264 = vsel %vm527, %v1259, 0
        %1266 = vmatprep.subr.bf16.mxu0 0
        %1267 = vmatpush1.bf16.xpose.msra.mxu0 %v1264
        %1268 = vmatprep.subr.bf16.mxu0 0
        %1269 = vmatpush1.bf16.xpose.msra.mxu0 0
        %1270 = vmatprep.subr.bf16.mxu0 0
        %1271 = vmatpush1.bf16.xpose.msra.mxu0 0
        %1272 = vmatprep.subr.bf16.mxu0 0
        %1273 = vmatpush1.bf16.xpose.msra.mxu0 0
        %1274 = vmatprep.subr.bf16.mxu0 0
        %1275 = vmatpush1.bf16.xpose.msra.mxu0 0
        %1276 = vmatprep.subr.bf16.mxu0 0
        %1277 = vmatpush1.bf16.xpose.msra.mxu0 0
        %1278 = vmatprep.subr.bf16.mxu0 0
        %1279 = vmatpush1.bf16.xpose.msra.mxu0 0
        %1280 = vmatprep.subr.bf16.mxu0 0
        %1281 = vmatpush1.bf16.xpose.msra.mxu0 0
        %1282 = vmatprep.subr.bf16.mxu0 0
        %1283 = vmatpush1.bf16.xpose.msra.mxu0 0
        %1284 = vmatprep.subr.bf16.mxu0 0
        %1285 = vmatpush1.bf16.xpose.msra.mxu0 0
        %1286 = vmatprep.subr.bf16.mxu0 0
        %1287 = vmatpush1.bf16.xpose.msra.mxu0 0
        %1288 = vmatprep.subr.bf16.mxu0 0
        %1289 = vmatpush1.bf16.xpose.msra.mxu0 0
        %1290 = vmatprep.subr.bf16.mxu0 0
        %1291 = vmatpush1.bf16.xpose.msra.mxu0 0
        %1292 = vmatprep.subr.bf16.mxu0 0
        %1293 = vmatpush1.bf16.xpose.msra.mxu0 0
        %1294 = vmatprep.subr.bf16.mxu0 0
        %1295 = vmatpush1.bf16.xpose.msra.mxu0 0
        %1296 = vmatprep.subr.bf16.mxu0 0
        %1297 = vmatpush1.bf16.xpose.msra.mxu0 0
        %1298 = vmatprep.mubr.bf16.mxu0 0
        %1299 = vmatmul.mubr.bf16.gmra.mrb[0].mxu0 %v1261
        %v1300 = vpop.f32.mrb[0].mxu0
        %v1301 = vadd.f32 0.0, %v1300
        %v1302 = vpop.f32.mrb[0].mxu0
        %v1303 = vpop.f32.mrb[0].mxu0
        %v1304 = vpop.f32.mrb[0].mxu0
        %1305 = vdwg.mxu0
        %1307 = vrot.lane.b32.xlu0 %v1256, 96
        %v1308 = vpop.permute.xlu0 %1307
        %v1310 = vsel %vm527, %v1256, 0
        %v1313 = vsel %vm527, %v1308, 0
        %1315 = vmatprep.subr.bf16.mxu0 0
        %1316 = vmatpush1.bf16.xpose.msra.mxu0 %v1313
        %1317 = vmatprep.subr.bf16.mxu0 0
        %1318 = vmatpush1.bf16.xpose.msra.mxu0 0
        %1319 = vmatprep.subr.bf16.mxu0 0
        %1320 = vmatpush1.bf16.xpose.msra.mxu0 0
        %1321 = vmatprep.subr.bf16.mxu0 0
        %1322 = vmatpush1.bf16.xpose.msra.mxu0 0
        %1323 = vmatprep.subr.bf16.mxu0 0
        %1324 = vmatpush1.bf16.xpose.msra.mxu0 0
        %1325 = vmatprep.subr.bf16.mxu0 0
        %1326 = vmatpush1.bf16.xpose.msra.mxu0 0
        %1327 = vmatprep.subr.bf16.mxu0 0
        %1328 = vmatpush1.bf16.xpose.msra.mxu0 0
        %1329 = vmatprep.subr.bf16.mxu0 0
        %1330 = vmatpush1.bf16.xpose.msra.mxu0 0
        %1331 = vmatprep.subr.bf16.mxu0 0
        %1332 = vmatpush1.bf16.xpose.msra.mxu0 0
        %1333 = vmatprep.subr.bf16.mxu0 0
        %1334 = vmatpush1.bf16.xpose.msra.mxu0 0
        %1335 = vmatprep.subr.bf16.mxu0 0
        %1336 = vmatpush1.bf16.xpose.msra.mxu0 0
        %1337 = vmatprep.subr.bf16.mxu0 0
        %1338 = vmatpush1.bf16.xpose.msra.mxu0 0
        %1339 = vmatprep.subr.bf16.mxu0 0
        %1340 = vmatpush1.bf16.xpose.msra.mxu0 0
        %1341 = vmatprep.subr.bf16.mxu0 0
        %1342 = vmatpush1.bf16.xpose.msra.mxu0 0
        %1343 = vmatprep.subr.bf16.mxu0 0
        %1344 = vmatpush1.bf16.xpose.msra.mxu0 0
        %1345 = vmatprep.subr.bf16.mxu0 0
        %1346 = vmatpush1.bf16.xpose.msra.mxu0 0
        %1347 = vmatprep.mubr.bf16.mxu0 0
        %1348 = vmatmul.mubr.bf16.gmra.mrb[0].mxu0 %v1310
        %v1349 = vpop.f32.mrb[0].mxu0
        %v1350 = vadd.f32 0.0, %v1349
        %v1351 = vpop.f32.mrb[0].mxu0
        %v1352 = vpop.f32.mrb[0].mxu0
        %v1353 = vpop.f32.mrb[0].mxu0
        %1354 = vdwg.mxu0
        %v1355 = vmul.f32 %v1301, 0.25
        %v1356 = vmul.f32 %v1350, 0.25
        %v1357 = vadd.f32 %v1355, %v405
        %v1358 = vadd.f32 %v1356, %v405
        %v1359 = vsel %vm627, %v1357, -inf
        %1360 = vmax.xlane.f32.xlu0 %v1359
        %v1361 = vpop.xlane.xlu0 %1360
        %v1362 = vsel %vm627, %v1358, -inf
        %1363 = vmax.xlane.f32.xlu0 %v1362
        %v1364 = vpop.xlane.xlu0 %1363
        %v1365 = vsub.f32 %v1357, %v1361
        %v1366 = vsub.f32 %v1358, %v1364
        %v1367 = vmul.f32 %v1365, 1.442695
        %v1368 = vpow.pop %v1367
        %v1369 = vmul.f32 %v1366, 1.442695
        %v1370 = vpow.pop %v1369
        %v1371 = vsel %vm627, %v1368, 0.0
        %1372 = vadd.xlane.f32.xlu0 %v1371
        %v1373 = vpop.xlane.xlu0 %1372
        %v1374 = vsel %vm627, %v1370, 0.0
        %1375 = vadd.xlane.f32.xlu0 %v1374
        %v1376 = vpop.xlane.xlu0 %1375
        %v1377 = vrcp.pop %v1373
        %v1378 = vrcp.pop %v1376
        %v1379 = vmul.f32 %v1368, %v1377
        %v1380 = vmul.f32 %v1370, %v1378
        %v1381 = vpack.c.bf16 %v1379, %v1379
        %v1382 = vpack.c.bf16 %v1380, %v1380
        %1383 = vrot.lane.b32.xlu0 %v1255, 64
        %v1384 = vpop.permute.xlu0 %1383
        %v1386 = vsel %vm627, %v1381, 0
        %v1389 = vsel %vm657, %v1384, 0
        %1391 = vmatprep.subr.bf16.mxu0 0
        %1392 = vmatpush1.bf16.msra.mxu0 %v1389
        %1393 = vmatprep.subr.bf16.mxu0 0
        %1394 = vmatpush1.bf16.msra.mxu0 0
        %1395 = vmatprep.subr.bf16.mxu0 0
        %1396 = vmatpush1.bf16.msra.mxu0 0
        %1397 = vmatprep.subr.bf16.mxu0 0
        %1398 = vmatpush1.bf16.msra.mxu0 0
        %1399 = vmatprep.subr.bf16.mxu0 0
        %1400 = vmatpush1.bf16.msra.mxu0 0
        %1401 = vmatprep.subr.bf16.mxu0 0
        %1402 = vmatpush1.bf16.msra.mxu0 0
        %1403 = vmatprep.subr.bf16.mxu0 0
        %1404 = vmatpush1.bf16.msra.mxu0 0
        %1405 = vmatprep.subr.bf16.mxu0 0
        %1406 = vmatpush1.bf16.msra.mxu0 0
        %1407 = vmatprep.subr.bf16.mxu0 0
        %1408 = vmatpush1.bf16.msra.mxu0 0
        %1409 = vmatprep.subr.bf16.mxu0 0
        %1410 = vmatpush1.bf16.msra.mxu0 0
        %1411 = vmatprep.subr.bf16.mxu0 0
        %1412 = vmatpush1.bf16.msra.mxu0 0
        %1413 = vmatprep.subr.bf16.mxu0 0
        %1414 = vmatpush1.bf16.msra.mxu0 0
        %1415 = vmatprep.subr.bf16.mxu0 0
        %1416 = vmatpush1.bf16.msra.mxu0 0
        %1417 = vmatprep.subr.bf16.mxu0 0
        %1418 = vmatpush1.bf16.msra.mxu0 0
        %1419 = vmatprep.subr.bf16.mxu0 0
        %1420 = vmatpush1.bf16.msra.mxu0 0
        %1421 = vmatprep.subr.bf16.mxu0 0
        %1422 = vmatpush1.bf16.msra.mxu0 0
        %1423 = vmatprep.mubr.bf16.mxu0 0
        %1424 = vmatmul.mubr.bf16.gmra.mrb[0].mxu0 %v1386
        %v1425 = vpop.f32.mrb[0].mxu0
        %v1426 = vadd.f32 0.0, %v1425
        %v1427 = vpop.f32.mrb[0].mxu0
        %v1428 = vpop.f32.mrb[0].mxu0
        %v1429 = vpop.f32.mrb[0].mxu0
        %1430 = vdwg.mxu0
        %1431 = vrot.lane.b32.xlu0 %v1256, 64
        %v1432 = vpop.permute.xlu0 %1431
        %v1434 = vsel %vm627, %v1382, 0
        %v1437 = vsel %vm657, %v1432, 0
        %1439 = vmatprep.subr.bf16.mxu0 0
        %1440 = vmatpush1.bf16.msra.mxu0 %v1437
        %1441 = vmatprep.subr.bf16.mxu0 0
        %1442 = vmatpush1.bf16.msra.mxu0 0
        %1443 = vmatprep.subr.bf16.mxu0 0
        %1444 = vmatpush1.bf16.msra.mxu0 0
        %1445 = vmatprep.subr.bf16.mxu0 0
        %1446 = vmatpush1.bf16.msra.mxu0 0
        %1447 = vmatprep.subr.bf16.mxu0 0
        %1448 = vmatpush1.bf16.msra.mxu0 0
        %1449 = vmatprep.subr.bf16.mxu0 0
        %1450 = vmatpush1.bf16.msra.mxu0 0
        %1451 = vmatprep.subr.bf16.mxu0 0
        %1452 = vmatpush1.bf16.msra.mxu0 0
        %1453 = vmatprep.subr.bf16.mxu0 0
        %1454 = vmatpush1.bf16.msra.mxu0 0
        %1455 = vmatprep.subr.bf16.mxu0 0
        %1456 = vmatpush1.bf16.msra.mxu0 0
        %1457 = vmatprep.subr.bf16.mxu0 0
        %1458 = vmatpush1.bf16.msra.mxu0 0
        %1459 = vmatprep.subr.bf16.mxu0 0
        %1460 = vmatpush1.bf16.msra.mxu0 0
        %1461 = vmatprep.subr.bf16.mxu0 0
        %1462 = vmatpush1.bf16.msra.mxu0 0
        %1463 = vmatprep.subr.bf16.mxu0 0
        %1464 = vmatpush1.bf16.msra.mxu0 0
        %1465 = vmatprep.subr.bf16.mxu0 0
        %1466 = vmatpush1.bf16.msra.mxu0 0
        %1467 = vmatprep.subr.bf16.mxu0 0
        %1468 = vmatpush1.bf16.msra.mxu0 0
        %1469 = vmatprep.subr.bf16.mxu0 0
        %1470 = vmatpush1.bf16.msra.mxu0 0
        %1471 = vmatprep.mubr.bf16.mxu0 0
        %1472 = vmatmul.mubr.bf16.gmra.mrb[0].mxu0 %v1434
        %v1473 = vpop.f32.mrb[0].mxu0
        %v1474 = vadd.f32 0.0, %v1473
        %v1475 = vpop.f32.mrb[0].mxu0
        %v1476 = vpop.f32.mrb[0].mxu0
        %v1477 = vpop.f32.mrb[0].mxu0
        %1478 = vdwg.mxu0
        %1479 = vst.msk [vmem:[#allocation2] sm:$0xff] %vm527, %v1426
        %1481 = vrot.lane.b32.xlu0 %v1474, 16
        %v1482 = vpop.permute.xlu0 %1481
        %1484 = vst.msk [vmem:[#allocation2] sm:$0xff] %vm754, %v1482
        %v1485 = vld [vmem:[#allocation2] sm:$0xff]
        %v1486 = vpack.c.bf16 %v1485, %v1485
        %s1487 = scalar_lea.vmem %s5, 64
        %v1488 = vld [vmem:[%s1487] sm:$0xf]
        %v1489 = vld [vmem:[%s1487 + $0x4] sm:$0xf]
        %v1490 = vld [vmem:[%s1487 + $0x8] sm:$0xf]
        %v1491 = vld [vmem:[%s1487 + $0xc] sm:$0xf]
        %v1492 = vld [vmem:[%s1487 + $0x10] sm:$0xf]
        %v1493 = vld [vmem:[%s1487 + $0x14] sm:$0xf]
        %v1494 = vld [vmem:[%s1487 + $0x18] sm:$0xf]
        %v1495 = vld [vmem:[%s1487 + $0x1c] sm:$0xf]
        %v1496 = vld [vmem:[%s1487 + $0x20] sm:$0xf]
        %v1497 = vld [vmem:[%s1487 + $0x24] sm:$0xf]
        %v1498 = vld [vmem:[%s1487 + $0x28] sm:$0xf]
        %v1499 = vld [vmem:[%s1487 + $0x2c] sm:$0xf]
        %v1500 = vld [vmem:[%s1487 + $0x30] sm:$0xf]
        %v1501 = vld [vmem:[%s1487 + $0x34] sm:$0xf]
        %v1502 = vld [vmem:[%s1487 + $0x38] sm:$0xf]
        %v1503 = vld [vmem:[%s1487 + $0x3c] sm:$0xf]
        %v1504 = vlaneseq
        %v1505 = vshrl.u32 %v1504, 7
        %v1506 = vsub.s32 1, %v1505
        %v1507 = vrot.slane %v1140, %v1506
        %v1524 = vunpack.c.l.b16 %v1488
        %v1525 = vunpack.c.l.b16 %v1489
        %v1526 = vunpack.c.l.b16 %v1490
        %v1527 = vunpack.c.l.b16 %v1491
        %v1528 = vunpack.c.l.b16 %v1492
        %v1529 = vunpack.c.l.b16 %v1493
        %v1530 = vunpack.c.l.b16 %v1494
        %v1531 = vunpack.c.l.b16 %v1495
        %v1532 = vunpack.c.l.b16 %v1496
        %v1533 = vunpack.c.l.b16 %v1497
        %v1534 = vunpack.c.l.b16 %v1498
        %v1535 = vunpack.c.l.b16 %v1499
        %v1536 = vunpack.c.l.b16 %v1500
        %v1537 = vunpack.c.l.b16 %v1501
        %v1538 = vunpack.c.l.b16 %v1502
        %v1539 = vunpack.c.l.b16 %v1503
        %v1540 = vpack.c.b16 %v1525, %v1524
        %v1541 = vpack.c.b16 %v1527, %v1526
        %v1542 = vpack.c.b16 %v1529, %v1528
        %v1543 = vpack.c.b16 %v1531, %v1530
        %v1544 = vpack.c.b16 %v1533, %v1532
        %v1545 = vpack.c.b16 %v1535, %v1534
        %v1546 = vpack.c.b16 %v1537, %v1536
        %v1547 = vpack.c.b16 %v1539, %v1538
        %1556 = vmatprep.subr.bf16.mxu0 0
        %1557 = vmatpush1.bf16.msra.mxu0 %v1540
        %1558 = vmatprep.subr.bf16.mxu0 0
        %1559 = vmatpush1.bf16.msra.mxu0 %v1541
        %1560 = vmatprep.subr.bf16.mxu0 0
        %1561 = vmatpush1.bf16.msra.mxu0 %v1542
        %1562 = vmatprep.subr.bf16.mxu0 0
        %1563 = vmatpush1.bf16.msra.mxu0 %v1543
        %1564 = vmatprep.subr.bf16.mxu0 0
        %1565 = vmatpush1.bf16.msra.mxu0 %v1544
        %1566 = vmatprep.subr.bf16.mxu0 0
        %1567 = vmatpush1.bf16.msra.mxu0 %v1545
        %1568 = vmatprep.subr.bf16.mxu0 0
        %1569 = vmatpush1.bf16.msra.mxu0 %v1546
        %1570 = vmatprep.subr.bf16.mxu0 0
        %1571 = vmatpush1.bf16.msra.mxu0 %v1547
        %1572 = vmatprep.subr.bf16.mxu0 0
        %1573 = vmatpush1.bf16.msra.mxu0 0
        %1574 = vmatprep.subr.bf16.mxu0 0
        %1575 = vmatpush1.bf16.msra.mxu0 0
        %1576 = vmatprep.subr.bf16.mxu0 0
        %1577 = vmatpush1.bf16.msra.mxu0 0
        %1578 = vmatprep.subr.bf16.mxu0 0
        %1579 = vmatpush1.bf16.msra.mxu0 0
        %1580 = vmatprep.subr.bf16.mxu0 0
        %1581 = vmatpush1.bf16.msra.mxu0 0
        %1582 = vmatprep.subr.bf16.mxu0 0
        %1583 = vmatpush1.bf16.msra.mxu0 0
        %1584 = vmatprep.subr.bf16.mxu0 0
        %1585 = vmatpush1.bf16.msra.mxu0 0
        %1586 = vmatprep.subr.bf16.mxu0 0
        %1587 = vmatpush1.bf16.msra.mxu0 0
        %1588 = vmatprep.mubr.bf16.mxu0 0
        %1589 = vmatmul.mubr.bf16.gmra.mrb[0].mxu0 %v1486
        %v1590 = vpop.f32.mrb[0].mxu0
        %v1591 = vadd.f32 %v1507, %v1590
        %v1592 = vpop.f32.mrb[0].mxu0
        %v1593 = vpop.f32.mrb[0].mxu0
        %v1594 = vpop.f32.mrb[0].mxu0
        %1595 = vdwg.mxu0
        %v1596 = vadd.f32 %v1591, %v1138
        %1597 = vadd.xlane.f32.xlu0 %v1596
        %v1598 = vpop.xlane.xlu0 %1597
        %v1599 = vmul.f32 %v1598, 0.03125
        %v1600 = vsub.f32 %v1596, %v1599
        %v1601 = vmul.f32 %v1600, %v373
        %v1602 = vmul.f32 %v1601, %v1601
        %1603 = vadd.xlane.f32.xlu0 %v1602
        %v1604 = vpop.xlane.xlu0 %1603
        %v1605 = vmul.f32 %v1604, 0.03125
        %v1606 = vadd.f32 %v1605, 1e-12
        %v1607 = vrsqrt.pop %v1606
        %v1608 = vmul.f32 %v1601, %v1607
        %v1609 = vlaneseq
        %v1610 = vshrl.u32 %v1609, 7
        %v1611 = vsub.s32 2, %v1610
        %v1612 = vrot.slane %v1140, %v1611
        %v1613 = vmul.f32 %v1608, %v1612
        %v1614 = vlaneseq
        %v1615 = vshrl.u32 %v1614, 7
        %v1616 = vsub.s32 3, %v1615
        %v1617 = vrot.slane %v1140, %v1616
        %v1618 = vadd.f32 %v1613, %v1617
        %v1619 = vpack.c.bf16 %v1618, %v1618
        %s1620 = scalar_lea.vmem %s6, 64
        %v1621 = vld [vmem:[%s1620] sm:$0xf]
        %v1622 = vld [vmem:[%s1620 + $0x4] sm:$0xf]
        %v1623 = vld [vmem:[%s1620 + $0x8] sm:$0xf]
        %v1624 = vld [vmem:[%s1620 + $0xc] sm:$0xf]
        %v1625 = vld [vmem:[%s1620 + $0x10] sm:$0xf]
        %v1626 = vld [vmem:[%s1620 + $0x14] sm:$0xf]
        %v1627 = vld [vmem:[%s1620 + $0x18] sm:$0xf]
        %v1628 = vld [vmem:[%s1620 + $0x1c] sm:$0xf]
        %v1629 = vld [vmem:[%s1620 + $0x20] sm:$0xf]
        %v1630 = vld [vmem:[%s1620 + $0x24] sm:$0xf]
        %v1631 = vld [vmem:[%s1620 + $0x28] sm:$0xf]
        %v1632 = vld [vmem:[%s1620 + $0x2c] sm:$0xf]
        %v1633 = vld [vmem:[%s1620 + $0x30] sm:$0xf]
        %v1634 = vld [vmem:[%s1620 + $0x34] sm:$0xf]
        %v1635 = vld [vmem:[%s1620 + $0x38] sm:$0xf]
        %v1636 = vld [vmem:[%s1620 + $0x3c] sm:$0xf]
        %v1637 = vlaneseq
        %v1638 = vshrl.u32 %v1637, 7
        %v1639 = vsub.s32 4, %v1638
        %v1640 = vrot.slane %v1140, %v1639
        %v1657 = vunpack.c.l.b16 %v1621
        %v1658 = vunpack.c.l.b16 %v1622
        %v1659 = vunpack.c.l.b16 %v1623
        %v1660 = vunpack.c.l.b16 %v1624
        %v1661 = vunpack.c.l.b16 %v1625
        %v1662 = vunpack.c.l.b16 %v1626
        %v1663 = vunpack.c.l.b16 %v1627
        %v1664 = vunpack.c.l.b16 %v1628
        %v1665 = vunpack.c.l.b16 %v1629
        %v1666 = vunpack.c.l.b16 %v1630
        %v1667 = vunpack.c.l.b16 %v1631
        %v1668 = vunpack.c.l.b16 %v1632
        %v1669 = vunpack.c.l.b16 %v1633
        %v1670 = vunpack.c.l.b16 %v1634
        %v1671 = vunpack.c.l.b16 %v1635
        %v1672 = vunpack.c.l.b16 %v1636
        %v1673 = vpack.c.b16 %v1658, %v1657
        %v1674 = vpack.c.b16 %v1660, %v1659
        %v1675 = vpack.c.b16 %v1662, %v1661
        %v1676 = vpack.c.b16 %v1664, %v1663
        %v1677 = vpack.c.b16 %v1666, %v1665
        %v1678 = vpack.c.b16 %v1668, %v1667
        %v1679 = vpack.c.b16 %v1670, %v1669
        %v1680 = vpack.c.b16 %v1672, %v1671
        %1689 = vmatprep.subr.bf16.mxu0 0
        %1690 = vmatpush1.bf16.msra.mxu0 %v1673
        %1691 = vmatprep.subr.bf16.mxu0 0
        %1692 = vmatpush1.bf16.msra.mxu0 %v1674
        %1693 = vmatprep.subr.bf16.mxu0 0
        %1694 = vmatpush1.bf16.msra.mxu0 %v1675
        %1695 = vmatprep.subr.bf16.mxu0 0
        %1696 = vmatpush1.bf16.msra.mxu0 %v1676
        %1697 = vmatprep.subr.bf16.mxu0 0
        %1698 = vmatpush1.bf16.msra.mxu0 %v1677
        %1699 = vmatprep.subr.bf16.mxu0 0
        %1700 = vmatpush1.bf16.msra.mxu0 %v1678
        %1701 = vmatprep.subr.bf16.mxu0 0
        %1702 = vmatpush1.bf16.msra.mxu0 %v1679
        %1703 = vmatprep.subr.bf16.mxu0 0
        %1704 = vmatpush1.bf16.msra.mxu0 %v1680
        %1705 = vmatprep.subr.bf16.mxu0 0
        %1706 = vmatpush1.bf16.msra.mxu0 0
        %1707 = vmatprep.subr.bf16.mxu0 0
        %1708 = vmatpush1.bf16.msra.mxu0 0
        %1709 = vmatprep.subr.bf16.mxu0 0
        %1710 = vmatpush1.bf16.msra.mxu0 0
        %1711 = vmatprep.subr.bf16.mxu0 0
        %1712 = vmatpush1.bf16.msra.mxu0 0
        %1713 = vmatprep.subr.bf16.mxu0 0
        %1714 = vmatpush1.bf16.msra.mxu0 0
        %1715 = vmatprep.subr.bf16.mxu0 0
        %1716 = vmatpush1.bf16.msra.mxu0 0
        %1717 = vmatprep.subr.bf16.mxu0 0
        %1718 = vmatpush1.bf16.msra.mxu0 0
        %1719 = vmatprep.subr.bf16.mxu0 0
        %1720 = vmatpush1.bf16.msra.mxu0 0
        %1721 = vmatprep.mubr.bf16.mxu0 0
        %1722 = vmatmul.mubr.bf16.gmra.mrb[0].mxu0 %v1619
        %v1723 = vpop.f32.mrb[0].mxu0
        %v1724 = vadd.f32 %v1640, %v1723
        %v1725 = vpop.f32.mrb[0].mxu0
        %v1726 = vpop.f32.mrb[0].mxu0
        %v1727 = vpop.f32.mrb[0].mxu0
        %1728 = vdwg.mxu0
        %v1729 = vmul.f32 %v1724, %v1724
        %v1730 = vmul.f32 %v1724, %v1729
        %v1731 = vmul.f32 %v1730, 0.044715
        %v1732 = vadd.f32 %v1724, %v1731
        %v1733 = vmul.f32 %v1732, 0.7978846
        %v1734 = vtanh.pop %v1733
        %v1735 = vadd.f32 %v1734, 1.0
        %v1736 = vmul.f32 %v1735, 0.5
        %v1737 = vmul.f32 %v1724, %v1736
        %v1738 = vpack.c.bf16 %v1737, %v1737
        %s1739 = scalar_lea.vmem %s7, 64
        %v1740 = vld [vmem:[%s1739] sm:$0xf]
        %v1741 = vld [vmem:[%s1739 + $0x4] sm:$0xf]
        %v1742 = vld [vmem:[%s1739 + $0x8] sm:$0xf]
        %v1743 = vld [vmem:[%s1739 + $0xc] sm:$0xf]
        %v1744 = vld [vmem:[%s1739 + $0x10] sm:$0xf]
        %v1745 = vld [vmem:[%s1739 + $0x14] sm:$0xf]
        %v1746 = vld [vmem:[%s1739 + $0x18] sm:$0xf]
        %v1747 = vld [vmem:[%s1739 + $0x1c] sm:$0xf]
        %v1748 = vld [vmem:[%s1739 + $0x20] sm:$0xf]
        %v1749 = vld [vmem:[%s1739 + $0x24] sm:$0xf]
        %v1750 = vld [vmem:[%s1739 + $0x28] sm:$0xf]
        %v1751 = vld [vmem:[%s1739 + $0x2c] sm:$0xf]
        %v1752 = vld [vmem:[%s1739 + $0x30] sm:$0xf]
        %v1753 = vld [vmem:[%s1739 + $0x34] sm:$0xf]
        %v1754 = vld [vmem:[%s1739 + $0x38] sm:$0xf]
        %v1755 = vld [vmem:[%s1739 + $0x3c] sm:$0xf]
        %v1756 = vlaneseq
        %v1757 = vshrl.u32 %v1756, 7
        %v1758 = vsub.s32 5, %v1757
        %v1759 = vrot.slane %v1140, %v1758
        %v1776 = vunpack.c.l.b16 %v1740
        %v1777 = vunpack.c.l.b16 %v1741
        %v1778 = vunpack.c.l.b16 %v1742
        %v1779 = vunpack.c.l.b16 %v1743
        %v1780 = vunpack.c.l.b16 %v1744
        %v1781 = vunpack.c.l.b16 %v1745
        %v1782 = vunpack.c.l.b16 %v1746
        %v1783 = vunpack.c.l.b16 %v1747
        %v1784 = vunpack.c.l.b16 %v1748
        %v1785 = vunpack.c.l.b16 %v1749
        %v1786 = vunpack.c.l.b16 %v1750
        %v1787 = vunpack.c.l.b16 %v1751
        %v1788 = vunpack.c.l.b16 %v1752
        %v1789 = vunpack.c.l.b16 %v1753
        %v1790 = vunpack.c.l.b16 %v1754
        %v1791 = vunpack.c.l.b16 %v1755
        %v1792 = vpack.c.b16 %v1777, %v1776
        %v1793 = vpack.c.b16 %v1779, %v1778
        %v1794 = vpack.c.b16 %v1781, %v1780
        %v1795 = vpack.c.b16 %v1783, %v1782
        %v1796 = vpack.c.b16 %v1785, %v1784
        %v1797 = vpack.c.b16 %v1787, %v1786
        %v1798 = vpack.c.b16 %v1789, %v1788
        %v1799 = vpack.c.b16 %v1791, %v1790
        %1808 = vmatprep.subr.bf16.mxu0 0
        %1809 = vmatpush1.bf16.msra.mxu0 %v1792
        %1810 = vmatprep.subr.bf16.mxu0 0
        %1811 = vmatpush1.bf16.msra.mxu0 %v1793
        %1812 = vmatprep.subr.bf16.mxu0 0
        %1813 = vmatpush1.bf16.msra.mxu0 %v1794
        %1814 = vmatprep.subr.bf16.mxu0 0
        %1815 = vmatpush1.bf16.msra.mxu0 %v1795
        %1816 = vmatprep.subr.bf16.mxu0 0
        %1817 = vmatpush1.bf16.msra.mxu0 %v1796
        %1818 = vmatprep.subr.bf16.mxu0 0
        %1819 = vmatpush1.bf16.msra.mxu0 %v1797
        %1820 = vmatprep.subr.bf16.mxu0 0
        %1821 = vmatpush1.bf16.msra.mxu0 %v1798
        %1822 = vmatprep.subr.bf16.mxu0 0
        %1823 = vmatpush1.bf16.msra.mxu0 %v1799
        %1824 = vmatprep.subr.bf16.mxu0 0
        %1825 = vmatpush1.bf16.msra.mxu0 0
        %1826 = vmatprep.subr.bf16.mxu0 0
        %1827 = vmatpush1.bf16.msra.mxu0 0
        %1828 = vmatprep.subr.bf16.mxu0 0
        %1829 = vmatpush1.bf16.msra.mxu0 0
        %1830 = vmatprep.subr.bf16.mxu0 0
        %1831 = vmatpush1.bf16.msra.mxu0 0
        %1832 = vmatprep.subr.bf16.mxu0 0
        %1833 = vmatpush1.bf16.msra.mxu0 0
        %1834 = vmatprep.subr.bf16.mxu0 0
        %1835 = vmatpush1.bf16.msra.mxu0 0
        %1836 = vmatprep.subr.bf16.mxu0 0
        %1837 = vmatpush1.bf16.msra.mxu0 0
        %1838 = vmatprep.subr.bf16.mxu0 0
        %1839 = vmatpush1.bf16.msra.mxu0 0
        %1840 = vmatprep.mubr.bf16.mxu0 0
        %1841 = vmatmul.mubr.bf16.gmra.mrb[0].mxu0 %v1738
        %v1842 = vpop.f32.mrb[0].mxu0
        %v1843 = vadd.f32 %v1759, %v1842
        %v1844 = vpop.f32.mrb[0].mxu0
        %v1845 = vpop.f32.mrb[0].mxu0
        %v1846 = vpop.f32.mrb[0].mxu0
        %1847 = vdwg.mxu0
        %v1848 = vadd.f32 %v1843, %v1618
        %1849 = vadd.xlane.f32.xlu0 %v1848
        %v1850 = vpop.xlane.xlu0 %1849
        %v1851 = vmul.f32 %v1850, 0.03125
        %v1852 = vsub.f32 %v1848, %v1851
        %v1853 = vmul.f32 %v1852, %v373
        %v1854 = vmul.f32 %v1853, %v1853
        %1855 = vadd.xlane.f32.xlu0 %v1854
        %v1856 = vpop.xlane.xlu0 %1855
        %v1857 = vmul.f32 %v1856, 0.03125
        %v1858 = vadd.f32 %v1857, 1e-12
        %v1859 = vrsqrt.pop %v1858
        %v1860 = vmul.f32 %v1853, %v1859
        %v1861 = vlaneseq
        %v1862 = vshrl.u32 %v1861, 7
        %v1863 = vsub.s32 6, %v1862
        %v1864 = vrot.slane %v1140, %v1863
        %v1865 = vmul.f32 %v1860, %v1864
        %v1866 = vlaneseq
        %v1867 = vshrl.u32 %v1866, 7
        %v1868 = vsub.s32 7, %v1867
        %v1869 = vrot.slane %v1140, %v1868
        %v1870 = vadd.f32 %v1865, %v1869
        %v1871 = vpack.c.bf16 %v1870, %v1870
        %v1872 = vld [vmem:[%s8] sm:$0xf]
        %v1873 = vld [vmem:[%s8 + $0x4] sm:$0xf]
        %v1874 = vld [vmem:[%s8 + $0x8] sm:$0xf]
        %v1875 = vld [vmem:[%s8 + $0xc] sm:$0xf]
        %v1876 = vld [vmem:[%s8 + $0x10] sm:$0xf]
        %v1877 = vld [vmem:[%s8 + $0x14] sm:$0xf]
        %v1878 = vld [vmem:[%s8 + $0x18] sm:$0xf]
        %v1879 = vld [vmem:[%s8 + $0x1c] sm:$0xf]
        %v1880 = vld [vmem:[%s8 + $0x20] sm:$0xf]
        %v1881 = vld [vmem:[%s8 + $0x24] sm:$0xf]
        %v1882 = vld [vmem:[%s8 + $0x28] sm:$0xf]
        %v1883 = vld [vmem:[%s8 + $0x2c] sm:$0xf]
        %v1884 = vld [vmem:[%s8 + $0x30] sm:$0xf]
        %v1885 = vld [vmem:[%s8 + $0x34] sm:$0xf]
        %v1886 = vld [vmem:[%s8 + $0x38] sm:$0xf]
        %v1887 = vld [vmem:[%s8 + $0x3c] sm:$0xf]
        %v1904 = vunpack.c.l.b16 %v1872
        %v1905 = vunpack.c.l.b16 %v1873
        %v1906 = vunpack.c.l.b16 %v1874
        %v1907 = vunpack.c.l.b16 %v1875
        %v1908 = vunpack.c.l.b16 %v1876
        %v1909 = vunpack.c.l.b16 %v1877
        %v1910 = vunpack.c.l.b16 %v1878
        %v1911 = vunpack.c.l.b16 %v1879
        %v1912 = vunpack.c.l.b16 %v1880
        %v1913 = vunpack.c.l.b16 %v1881
        %v1914 = vunpack.c.l.b16 %v1882
        %v1915 = vunpack.c.l.b16 %v1883
        %v1916 = vunpack.c.l.b16 %v1884
        %v1917 = vunpack.c.l.b16 %v1885
        %v1918 = vunpack.c.l.b16 %v1886
        %v1919 = vunpack.c.l.b16 %v1887
        %v1920 = vpack.c.b16 %v1905, %v1904
        %v1921 = vpack.c.b16 %v1907, %v1906
        %v1922 = vpack.c.b16 %v1909, %v1908
        %v1923 = vpack.c.b16 %v1911, %v1910
        %v1924 = vpack.c.b16 %v1913, %v1912
        %v1925 = vpack.c.b16 %v1915, %v1914
        %v1926 = vpack.c.b16 %v1917, %v1916
        %v1927 = vpack.c.b16 %v1919, %v1918
        %v1937 = vrot.slane %v374, 2
        %1939 = vmatprep.subr.bf16.mxu0 0
        %1940 = vmatpush1.bf16.msra.mxu0 %v1920
        %1941 = vmatprep.subr.bf16.mxu0 0
        %1942 = vmatpush1.bf16.msra.mxu0 %v1921
        %1943 = vmatprep.subr.bf16.mxu0 0
        %1944 = vmatpush1.bf16.msra.mxu0 %v1922
        %1945 = vmatprep.subr.bf16.mxu0 0
        %1946 = vmatpush1.bf16.msra.mxu0 %v1923
        %1947 = vmatprep.subr.bf16.mxu0 0
        %1948 = vmatpush1.bf16.msra.mxu0 %v1924
        %1949 = vmatprep.subr.bf16.mxu0 0
        %1950 = vmatpush1.bf16.msra.mxu0 %v1925
        %1951 = vmatprep.subr.bf16.mxu0 0
        %1952 = vmatpush1.bf16.msra.mxu0 %v1926
        %1953 = vmatprep.subr.bf16.mxu0 0
        %1954 = vmatpush1.bf16.msra.mxu0 %v1927
        %1955 = vmatprep.subr.bf16.mxu0 0
        %1956 = vmatpush1.bf16.msra.mxu0 0
        %1957 = vmatprep.subr.bf16.mxu0 0
        %1958 = vmatpush1.bf16.msra.mxu0 0
        %1959 = vmatprep.subr.bf16.mxu0 0
        %1960 = vmatpush1.bf16.msra.mxu0 0
        %1961 = vmatprep.subr.bf16.mxu0 0
        %1962 = vmatpush1.bf16.msra.mxu0 0
        %1963 = vmatprep.subr.bf16.mxu0 0
        %1964 = vmatpush1.bf16.msra.mxu0 0
        %1965 = vmatprep.subr.bf16.mxu0 0
        %1966 = vmatpush1.bf16.msra.mxu0 0
        %1967 = vmatprep.subr.bf16.mxu0 0
        %1968 = vmatpush1.bf16.msra.mxu0 0
        %1969 = vmatprep.subr.bf16.mxu0 0
        %1970 = vmatpush1.bf16.msra.mxu0 0
        %1971 = vmatprep.mubr.bf16.mxu0 0
        %1972 = vmatmul.mubr.bf16.gmra.mrb[0].mxu0 %v1871
        %v1973 = vpop.f32.mrb[0].mxu0
        %v1974 = vadd.f32 %v1937, %v1973
        %v1975 = vpop.f32.mrb[0].mxu0
        %v1976 = vpop.f32.mrb[0].mxu0
        %v1977 = vpop.f32.mrb[0].mxu0
        %1978 = vdwg.mxu0
        %v1979 = vtanh.pop %v1974
        %v1980 = vpack.c.bf16 %v1979, %v1979
        %v1981 = vld [vmem:[%s9] sm:$0xf]
        %v1982 = vld [vmem:[%s9 + $0x4] sm:$0xf]
        %v1983 = vld [vmem:[%s9 + $0x8] sm:$0xf]
        %v1984 = vld [vmem:[%s9 + $0xc] sm:$0xf]
        %v1985 = vld [vmem:[%s9 + $0x10] sm:$0xf]
        %v1986 = vld [vmem:[%s9 + $0x14] sm:$0xf]
        %v1987 = vld [vmem:[%s9 + $0x18] sm:$0xf]
        %v1988 = vld [vmem:[%s9 + $0x1c] sm:$0xf]
        %v1989 = vld [vmem:[%s9 + $0x20] sm:$0xf]
        %v1990 = vld [vmem:[%s9 + $0x24] sm:$0xf]
        %v1991 = vld [vmem:[%s9 + $0x28] sm:$0xf]
        %v1992 = vld [vmem:[%s9 + $0x2c] sm:$0xf]
        %v1993 = vld [vmem:[%s9 + $0x30] sm:$0xf]
        %v1994 = vld [vmem:[%s9 + $0x34] sm:$0xf]
        %v1995 = vld [vmem:[%s9 + $0x38] sm:$0xf]
        %v1996 = vld [vmem:[%s9 + $0x3c] sm:$0xf]
        %v2013 = vunpack.c.l.b16 %v1981
        %v2014 = vunpack.c.l.b16 %v1982
        %v2015 = vunpack.c.l.b16 %v1983
        %v2016 = vunpack.c.l.b16 %v1984
        %v2017 = vunpack.c.l.b16 %v1985
        %v2018 = vunpack.c.l.b16 %v1986
        %v2019 = vunpack.c.l.b16 %v1987
        %v2020 = vunpack.c.l.b16 %v1988
        %v2021 = vunpack.c.l.b16 %v1989
        %v2022 = vunpack.c.l.b16 %v1990
        %v2023 = vunpack.c.l.b16 %v1991
        %v2024 = vunpack.c.l.b16 %v1992
        %v2025 = vunpack.c.l.b16 %v1993
        %v2026 = vunpack.c.l.b16 %v1994
        %v2027 = vunpack.c.l.b16 %v1995
        %v2028 = vunpack.c.l.b16 %v1996
        %v2029 = vpack.c.b16 %v2014, %v2013
        %v2030 = vpack.c.b16 %v2016, %v2015
        %v2031 = vpack.c.b16 %v2018, %v2017
        %v2032 = vpack.c.b16 %v2020, %v2019
        %v2033 = vpack.c.b16 %v2022, %v2021
        %v2034 = vpack.c.b16 %v2024, %v2023
        %v2035 = vpack.c.b16 %v2026, %v2025
        %v2036 = vpack.c.b16 %v2028, %v2027
        %v2045 = vrot.slane %v374, 3
        %2047 = vmatprep.subr.bf16.mxu0 0
        %2048 = vmatpush1.bf16.msra.mxu0 %v2029
        %2049 = vmatprep.subr.bf16.mxu0 0
        %2050 = vmatpush1.bf16.msra.mxu0 %v2030
        %2051 = vmatprep.subr.bf16.mxu0 0
        %2052 = vmatpush1.bf16.msra.mxu0 %v2031
        %2053 = vmatprep.subr.bf16.mxu0 0
        %2054 = vmatpush1.bf16.msra.mxu0 %v2032
        %2055 = vmatprep.subr.bf16.mxu0 0
        %2056 = vmatpush1.bf16.msra.mxu0 %v2033
        %2057 = vmatprep.subr.bf16.mxu0 0
        %2058 = vmatpush1.bf16.msra.mxu0 %v2034
        %2059 = vmatprep.subr.bf16.mxu0 0
        %2060 = vmatpush1.bf16.msra.mxu0 %v2035
        %2061 = vmatprep.subr.bf16.mxu0 0
        %2062 = vmatpush1.bf16.msra.mxu0 %v2036
        %2063 = vmatprep.subr.bf16.mxu0 0
        %2064 = vmatpush1.bf16.msra.mxu0 0
        %2065 = vmatprep.subr.bf16.mxu0 0
        %2066 = vmatpush1.bf16.msra.mxu0 0
        %2067 = vmatprep.subr.bf16.mxu0 0
        %2068 = vmatpush1.bf16.msra.mxu0 0
        %2069 = vmatprep.subr.bf16.mxu0 0
        %2070 = vmatpush1.bf16.msra.mxu0 0
        %2071 = vmatprep.subr.bf16.mxu0 0
        %2072 = vmatpush1.bf16.msra.mxu0 0
        %2073 = vmatprep.subr.bf16.mxu0 0
        %2074 = vmatpush1.bf16.msra.mxu0 0
        %2075 = vmatprep.subr.bf16.mxu0 0
        %2076 = vmatpush1.bf16.msra.mxu0 0
        %2077 = vmatprep.subr.bf16.mxu0 0
        %2078 = vmatpush1.bf16.msra.mxu0 0
        %2079 = vmatprep.mubr.bf16.mxu0 0
        %2080 = vmatmul.mubr.bf16.gmra.mrb[0].mxu0 %v1980
        %v2081 = vpop.f32.mrb[0].mxu0
        %v2082 = vadd.f32 %v2045, %v2081
        %v2083 = vpop.f32.mrb[0].mxu0
        %v2084 = vpop.f32.mrb[0].mxu0
        %v2085 = vpop.f32.mrb[0].mxu0
        %2086 = vdwg.mxu0
        %2087 = vst [vmem:[%s360] sm:$0x1] %v2082
        %s2088 = sand.u32 %s252, 1
        %s2089 = scalar_lea.sflag [#allocation4], %s2088
        %s2090 = sand.u32 %s252, 1
        %s2091 = scalar_lea.vmem [#allocation3], %s2090
        // Predicated region
        $region61: #{bert_class_forward.1} parent=59 // pred_check
          %p2092 = pneg %p262
        $region62: #{bert_class_forward.1} parent=59 // pred_check_branch
          %2094 = sbr.rel (%p2092) target = $region64
        $region63: #{bert_class_forward.1} parent=59 // pred_region
          %s2096 = ssub.s32 16, 16
          %2097 = vsyncadd %s2089, %s2096
          %s2098 = smul.addr %s24, 16
          %s2099 = scalar_lea.hbm %s10, %s2098
          %s2101 = sshll.u32 %s2091, 4
          %s2102 = int_to_ptr.vmem [resolvable:$true] %s2101
          %2104 = dma.vmem_to_hbm [thread:$0]  %s2102, 16, %s2099, %s2089
        $region64: #{bert_class_forward.1} parent=59 // pred_fallthru
          _
      $region60: #{bert_class_forward.1} parent=5 // pred_fallthru
        _
      %p2105 = scmp.le.s32.totalorder 2, %s19
      // Predicated region
      $region65: #{bert_class_forward.1} parent=5 // pred_check
        %p2106 = pneg %p2105
      $region66: #{bert_class_forward.1} parent=5 // pred_check_branch
        %2108 = sbr.rel (%p2106) target = $region68
      $region67: #{bert_class_forward.1} parent=5 // pred_region
        %s2109 = ssub.s32 %s19, 2
        // Predicated region
        $region69: #{bert_class_forward.1} parent=67 // pred_check
          %p2110 = pneg %p268
        $region70: #{bert_class_forward.1} parent=67 // pred_check_branch
          %2112 = sbr.rel (%p2110) target = $region72
        $region71: #{bert_class_forward.1} parent=67 // pred_region
          %s2113 = sand.u32 %s253, 1
          %s2114 = scalar_lea.sflag [#allocation4], %s2113
          %s2115 = sand.u32 %s253, 1
          %s2116 = scalar_lea.vmem [#allocation3], %s2115
          %2117 = dma.done %s2114, 16
        $region72: #{bert_class_forward.1} parent=67 // pred_fallthru
          _
      $region68: #{bert_class_forward.1} parent=5 // pred_fallthru
        _
    $region6: #{bert_class_forward.1} parent=1 // loop_footer
      %s23 = sadd.s32 1, %s19
    $region7: #{bert_class_forward.1} parent=1 // loop_footer_branch
      %18 = sbr.rel target = $region3
    $region8: #{bert_class_forward.1} parent=1 // loop_exit
      _
    %2118 = vsyncpa [#allocation4], 1
    %s2119 = scalar_lea.sflag [#allocation4], 1
    %2120 = vsyncpa %s2119, 1

</llo_original>
